<compile_context>
chip_gen: v5e
topology: v5e:2x2
jax: 0.10.0
libtpu: 0.0.40
codegen_flags: <defaults>
</compile_context>

<pallas_src>
import numpy as np
import jax
import jax.numpy as jnp
from jax.experimental import pallas as pl
from jax.experimental.pallas import tpu as pltpu


# -------------------------------------------------------------------------
# Kernel: whole decoder forward (2x linear+relu, 3 LSTM passes, output head)
# -------------------------------------------------------------------------
def decoder_kernel(x_ref, wlin_ref, blin_ref,
                   wih1_ref, whh1_ref, b1_ref,
                   wih2_ref, whh2_ref, b2_ref,
                   wout_ref, bout_ref,
                   out_ref,
                   seq_ref, xg_ref):
    BP, D = x_ref.shape                  # BP = batch padded to sublane tile (8)
    SBP = seq_ref.shape[0]
    S = SBP // BP
    D3 = 3 * D

    f32 = jnp.float32
    bf16 = jnp.bfloat16

    # Weights arrive pre-cast to bf16 (single MXU pass); biases stay f32.
    wlin = wlin_ref[...]
    blin = blin_ref[...]
    wih1 = wih1_ref[...]
    whh1 = whh1_ref[...]
    b1 = b1_ref[...]
    wih2 = wih2_ref[...]
    whh2 = whh2_ref[...]
    b2 = b2_ref[...]

    # --- bottleneck: Linear -> ReLU -> (same) Linear -> ReLU ---------------
    x = x_ref[...]
    h = jnp.maximum(
        jnp.dot(x.astype(bf16), wlin, preferred_element_type=f32) + blin, 0.0)
    h = jnp.maximum(
        jnp.dot(h.astype(bf16), wlin, preferred_element_type=f32) + blin, 0.0)

    def gate_math(gates, c_prev):
        # gate layout: [ i | f | o | g ]  (sigmoid gates contiguous), all f32
        sig = jax.nn.sigmoid(gates[:, :D3])      # one EUP pass over 3D lanes
        g = jnp.tanh(gates[:, D3:])              # one EUP pass over D lanes
        i = sig[:, :D]
        f = sig[:, D:2 * D]
        o = sig[:, 2 * D:D3]
        c = f * c_prev + i * g
        h_new = o * jnp.tanh(c)
        return h_new, c

    zeros = jnp.zeros((BP, D), f32)

    # --- pass 1: rnn1; every step sees the same repeated vector h ----------
    # Input projection + bias hoisted out of the serial chain entirely.
    xg1 = jnp.dot(h.astype(bf16), wih1, preferred_element_type=f32) + b1

    h_prev, c_prev = zeros, zeros
    for t in range(S):                                    # static unroll (S small)
        gates = xg1 + jnp.dot(h_prev.astype(bf16), whh1,
                              preferred_element_type=f32)
        h_prev, c_prev = gate_math(gates, c_prev)
        # aligned full-tile store (BP = 8 rows)
        seq_ref[t * BP:(t + 1) * BP, :] = h_prev

    # --- passes 2 & 3: rnn2 (shared weights), batched input projections ----
    for _pass in range(2):
        # One well-shaped (S*BP, D) @ (D, 4D) bf16 matmul off the critical
        # path, bias folded in once; recurrence below only does h_prev @ whh2.
        xg_ref[...] = (jnp.dot(seq_ref[...].astype(bf16), wih2,
                               preferred_element_type=f32) + b2)
        h_prev, c_prev = zeros, zeros
        for t in range(S):
            gates = (xg_ref[t * BP:(t + 1) * BP, :]
                     + jnp.dot(h_prev.astype(bf16), whh2,
                               preferred_element_type=f32))
            h_prev, c_prev = gate_math(gates, c_prev)
            # safe in-place overwrite: this pass's input projections were
            # already captured into xg_ref above.
            seq_ref[t * BP:(t + 1) * BP, :] = h_prev

    # --- batched output projection: one matmul + one store ------------------
    # (F=1 -> lane-sparse store; negligible at these sizes.)
    out_ref[...] = (jnp.dot(seq_ref[...].astype(bf16), wout_ref[...],
                            preferred_element_type=f32) + bout_ref[...])


# -------------------------------------------------------------------------
# Wrapper
# -------------------------------------------------------------------------
def decoder_forward(x, params, seq_len):
    B, D = x.shape
    F = params["w_out"].shape[1]
    bf16 = jnp.bfloat16

    # Pad batch to the f32 sublane tile so every per-step slab access inside
    # the kernel is a full aligned (8, lanes) tile.
    BP = max(8, ((B + 7) // 8) * 8)
    x_pad = jnp.zeros((BP, D), jnp.float32).at[:B, :].set(x)

    args = (x_pad,
            params["w_lin"].astype(bf16), params["b_lin"],
            params["w_ih1"].astype(bf16), params["w_hh1"].astype(bf16), params["b1"],
            params["w_ih2"].astype(bf16), params["w_hh2"].astype(bf16), params["b2"],
            params["w_out"].astype(bf16), params["b_out"])

    out_flat = pl.pallas_call(
        decoder_kernel,
        out_shape=jax.ShapeDtypeStruct((seq_len * BP, F), jnp.float32),
        in_specs=[pl.BlockSpec(memory_space=pltpu.MemorySpace.VMEM)] * len(args),
        out_specs=pl.BlockSpec(memory_space=pltpu.MemorySpace.VMEM),
        scratch_shapes=[pltpu.VMEM((seq_len * BP, D), jnp.float32),       # hidden slab
                        pltpu.VMEM((seq_len * BP, 4 * D), jnp.float32)],  # input gates
    )(*args)

    # rows are (t0_b0..t0_b7, t1_b0..,...) -> (S, BP, F) -> drop padded rows
    # -> batch_first (B, S, F)
    return jnp.transpose(out_flat.reshape(seq_len, BP, F)[:, :B, :], (1, 0, 2))


# -------------------------------------------------------------------------
# Pure-JAX f32 reference (same math / same i|f|o|g gate layout)
# -------------------------------------------------------------------------
def decoder_reference(x, p, seq_len):
    D = x.shape[1]
    h = jnp.maximum(x @ p["w_lin"] + p["b_lin"], 0.0)
    h = jnp.maximum(h @ p["w_lin"] + p["b_lin"], 0.0)

    def lstm(seq, wih, whh, b):  # seq: (S, B, D), gate order i|f|o|g
        def step(carry, x_t):
            hp, cp = carry
            gt = x_t @ wih + hp @ whh + b
            i = jax.nn.sigmoid(gt[:, :D])
            f = jax.nn.sigmoid(gt[:, D:2 * D])
            o = jax.nn.sigmoid(gt[:, 2 * D:3 * D])
            g = jnp.tanh(gt[:, 3 * D:])
            c = f * cp + i * g
            hn = o * jnp.tanh(c)
            return (hn, c), hn
        B = seq.shape[1]
        init = (jnp.zeros((B, D), jnp.float32), jnp.zeros((B, D), jnp.float32))
        _, out = jax.lax.scan(step, init, seq)
        return out

    seq_in = jnp.broadcast_to(h, (seq_len,) + h.shape)
    s1 = lstm(seq_in, p["w_ih1"], p["w_hh1"], p["b1"])
    s2 = lstm(s1, p["w_ih2"], p["w_hh2"], p["b2"])
    s3 = lstm(s2, p["w_ih2"], p["w_hh2"], p["b2"])
    y = s3 @ p["w_out"] + p["b_out"]          # (S, B, F)
    return jnp.transpose(y, (1, 0, 2))


# -------------------------------------------------------------------------
# Deterministic parameter construction (PyTorch-style uniform init, stored
# pre-transposed as (in, out)).  LSTM gate columns use the i|f|o|g convention
# used by kernel+reference; to import real PyTorch weights (i|f|g|o), permute
# the last two gate blocks of w_ih/w_hh/bias.
# -------------------------------------------------------------------------
def make_params(key, input_dim, n_features):
    D, F = input_dim, n_features
    ks = jax.random.split(key, 12)

    def u(k, shape, fan_in):
        bound = 1.0 / np.sqrt(fan_in)
        return jax.random.uniform(k, shape, jnp.float32, -bound, bound)

    params = {
        # nn.Linear(D, D): weight stored as (in, out)
        "w_lin": u(ks[0], (D, D), D),
        "b_lin": u(ks[1], (1, D), D),
        # rnn1: LSTM(D -> D), weights stored as (in, 4D), gate order i|f|o|g
        "w_ih1": u(ks[2], (D, 4 * D), D),
        "w_hh1": u(ks[3], (D, 4 * D), D),
        "b1":    u(ks[4], (1, 4 * D), D) + u(ks[5], (1, 4 * D), D),  # b_ih + b_hh
        # rnn2: LSTM(D -> D)
        "w_ih2": u(ks[6], (D, 4 * D), D),
        "w_hh2": u(ks[7], (D, 4 * D), D),
        "b2":    u(ks[8], (1, 4 * D), D) + u(ks[9], (1, 4 * D), D),
        # output_layer: nn.Linear(D, F)
        "w_out": u(ks[10], (D, F), D),
        "b_out": u(ks[11], (1, F), D),
    }
    return params


if __name__ == "__main__":
    batch = 2
    input_dim = 32
    seq_len = 8
    n_features = 1

    key = jax.random.PRNGKey(0)
    kx, kp = jax.random.split(key)
    x = jax.random.normal(kx, (batch, input_dim), jnp.float32)
    params = make_params(kp, input_dim, n_features)

    out = decoder_forward(x, params, seq_len)
    out = jax.block_until_ready(out)

    ref = jax.block_until_ready(decoder_reference(x, params, seq_len))

    assert out.shape == (batch, seq_len, n_features), out.shape
    # tolerance covers the intentional bf16 MXU-operand cast vs the f32 reference
    np.testing.assert_allclose(np.asarray(out), np.asarray(ref), rtol=2e-2, atol=2e-2)

    print("KERNEL_OK")
</pallas_src>

<mosaic_0001>
module attributes {stable_mosaic.version = 11 : i64} {
  func.func @decoder_kernel(%arg0: memref<8x32xf32, #tpu.memory_space<vmem>>, %arg1: memref<32x32xbf16, #tpu.memory_space<vmem>>, %arg2: memref<1x32xf32, #tpu.memory_space<vmem>>, %arg3: memref<32x128xbf16, #tpu.memory_space<vmem>>, %arg4: memref<32x128xbf16, #tpu.memory_space<vmem>>, %arg5: memref<1x128xf32, #tpu.memory_space<vmem>>, %arg6: memref<32x128xbf16, #tpu.memory_space<vmem>>, %arg7: memref<32x128xbf16, #tpu.memory_space<vmem>>, %arg8: memref<1x128xf32, #tpu.memory_space<vmem>>, %arg9: memref<32x1xbf16, #tpu.memory_space<vmem>>, %arg10: memref<1x1xf32, #tpu.memory_space<vmem>>, %arg11: memref<64x1xf32, #tpu.memory_space<vmem>>, %arg12: memref<64x32xf32, #tpu.memory_space<vmem>>, %arg13: memref<64x128xf32, #tpu.memory_space<vmem>>) attributes {dimension_semantics = [], scalar_prefetch = 0 : i64, scratch_operands = 2 : i64, tpu.core_type = #tpu.core_type<tc>} {
    %c0 = arith.constant 0 : index
    %c0_0 = arith.constant 0 : index
    %0 = vector.load %arg1[%c0, %c0_0] : memref<32x32xbf16, #tpu.memory_space<vmem>>, vector<32x32xbf16>
    %c0_1 = arith.constant 0 : index
    %c0_2 = arith.constant 0 : index
    %1 = vector.load %arg2[%c0_1, %c0_2] : memref<1x32xf32, #tpu.memory_space<vmem>>, vector<1x32xf32>
    %c0_3 = arith.constant 0 : index
    %c0_4 = arith.constant 0 : index
    %2 = vector.load %arg3[%c0_3, %c0_4] : memref<32x128xbf16, #tpu.memory_space<vmem>>, vector<32x128xbf16>
    %c0_5 = arith.constant 0 : index
    %c0_6 = arith.constant 0 : index
    %3 = vector.load %arg4[%c0_5, %c0_6] : memref<32x128xbf16, #tpu.memory_space<vmem>>, vector<32x128xbf16>
    %c0_7 = arith.constant 0 : index
    %c0_8 = arith.constant 0 : index
    %4 = vector.load %arg5[%c0_7, %c0_8] : memref<1x128xf32, #tpu.memory_space<vmem>>, vector<1x128xf32>
    %c0_9 = arith.constant 0 : index
    %c0_10 = arith.constant 0 : index
    %5 = vector.load %arg6[%c0_9, %c0_10] : memref<32x128xbf16, #tpu.memory_space<vmem>>, vector<32x128xbf16>
    %c0_11 = arith.constant 0 : index
    %c0_12 = arith.constant 0 : index
    %6 = vector.load %arg7[%c0_11, %c0_12] : memref<32x128xbf16, #tpu.memory_space<vmem>>, vector<32x128xbf16>
    %c0_13 = arith.constant 0 : index
    %c0_14 = arith.constant 0 : index
    %7 = vector.load %arg8[%c0_13, %c0_14] : memref<1x128xf32, #tpu.memory_space<vmem>>, vector<1x128xf32>
    %c0_15 = arith.constant 0 : index
    %c0_16 = arith.constant 0 : index
    %8 = vector.load %arg0[%c0_15, %c0_16] : memref<8x32xf32, #tpu.memory_space<vmem>>, vector<8x32xf32>
    %9 = arith.truncf %8 : vector<8x32xf32> to vector<8x32xbf16>
    %cst = arith.constant dense<0.000000e+00> : vector<8x32xf32>
    %10 = tpu.matmul %9, %0, %cst {dimension_numbers = #tpu.dot_dimension_numbers<[1], [0], [0], [1], [0, 0, 1, 1], [], []>} : vector<8x32xbf16>, vector<32x32xbf16>, vector<8x32xf32> -> vector<8x32xf32>
    %11 = vector.broadcast %1 : vector<1x32xf32> to vector<8x32xf32>
    %12 = arith.addf %10, %11 : vector<8x32xf32>
    %cst_17 = arith.constant 0.000000e+00 : f32
    %13 = vector.broadcast %cst_17 : f32 to vector<8x32xf32>
    %14 = arith.maximumf %12, %13 : vector<8x32xf32>
    %15 = arith.truncf %14 : vector<8x32xf32> to vector<8x32xbf16>
    %cst_18 = arith.constant dense<0.000000e+00> : vector<8x32xf32>
    %16 = tpu.matmul %15, %0, %cst_18 {dimension_numbers = #tpu.dot_dimension_numbers<[1], [0], [0], [1], [0, 0, 1, 1], [], []>} : vector<8x32xbf16>, vector<32x32xbf16>, vector<8x32xf32> -> vector<8x32xf32>
    %17 = vector.broadcast %1 : vector<1x32xf32> to vector<8x32xf32>
    %18 = arith.addf %16, %17 : vector<8x32xf32>
    %cst_19 = arith.constant 0.000000e+00 : f32
    %19 = vector.broadcast %cst_19 : f32 to vector<8x32xf32>
    %20 = arith.maximumf %18, %19 : vector<8x32xf32>
    %cst_20 = arith.constant 0.000000e+00 : f32
    %21 = vector.broadcast %cst_20 : f32 to vector<8x32xf32>
    %22 = arith.truncf %20 : vector<8x32xf32> to vector<8x32xbf16>
    %cst_21 = arith.constant dense<0.000000e+00> : vector<8x128xf32>
    %23 = tpu.matmul %22, %2, %cst_21 {dimension_numbers = #tpu.dot_dimension_numbers<[1], [0], [0], [1], [0, 0, 1, 1], [], []>} : vector<8x32xbf16>, vector<32x128xbf16>, vector<8x128xf32> -> vector<8x128xf32>
    %24 = vector.broadcast %4 : vector<1x128xf32> to vector<8x128xf32>
    %25 = arith.addf %23, %24 : vector<8x128xf32>
    %26 = arith.truncf %21 : vector<8x32xf32> to vector<8x32xbf16>
    %cst_22 = arith.constant dense<0.000000e+00> : vector<8x128xf32>
    %27 = tpu.matmul %26, %3, %cst_22 {dimension_numbers = #tpu.dot_dimension_numbers<[1], [0], [0], [1], [0, 0, 1, 1], [], []>} : vector<8x32xbf16>, vector<32x128xbf16>, vector<8x128xf32> -> vector<8x128xf32>
    %28 = arith.addf %25, %27 : vector<8x128xf32>
    %29 = vector.extract_strided_slice %28 {offsets = [0, 0], sizes = [8, 96], strides = [1, 1]} : vector<8x128xf32> to vector<8x96xf32>
    %30 = arith.negf %29 : vector<8x96xf32>
    %31 = math.exp %30 : vector<8x96xf32>
    %cst_23 = arith.constant 1.000000e+00 : f32
    %32 = vector.broadcast %cst_23 : f32 to vector<8x96xf32>
    %33 = arith.addf %32, %31 : vector<8x96xf32>
    %34 = arith.divf %32, %33 : vector<8x96xf32>
    %35 = vector.extract_strided_slice %28 {offsets = [0, 96], sizes = [8, 32], strides = [1, 1]} : vector<8x128xf32> to vector<8x32xf32>
    %36 = math.tanh %35 : vector<8x32xf32>
    %37 = vector.extract_strided_slice %34 {offsets = [0, 0], sizes = [8, 32], strides = [1, 1]} : vector<8x96xf32> to vector<8x32xf32>
    %38 = vector.extract_strided_slice %34 {offsets = [0, 32], sizes = [8, 32], strides = [1, 1]} : vector<8x96xf32> to vector<8x32xf32>
    %39 = vector.extract_strided_slice %34 {offsets = [0, 64], sizes = [8, 32], strides = [1, 1]} : vector<8x96xf32> to vector<8x32xf32>
    %40 = arith.mulf %38, %21 : vector<8x32xf32>
    %41 = arith.mulf %37, %36 : vector<8x32xf32>
    %42 = arith.addf %40, %41 : vector<8x32xf32>
    %43 = math.tanh %42 : vector<8x32xf32>
    %44 = arith.mulf %39, %43 : vector<8x32xf32>
    %c0_24 = arith.constant 0 : index
    %c0_25 = arith.constant 0 : index
    %45 = vector.load %arg12[%c0_24, %c0_25] : memref<64x32xf32, #tpu.memory_space<vmem>>, vector<8x32xf32>
    tpu.vector_store %arg12[%c0_24, %c0_25], %44 {strides = array<i32>} : memref<64x32xf32, #tpu.memory_space<vmem>>, vector<8x32xf32>,
    %46 = arith.truncf %44 : vector<8x32xf32> to vector<8x32xbf16>
    %cst_26 = arith.constant dense<0.000000e+00> : vector<8x128xf32>
    %47 = tpu.matmul %46, %3, %cst_26 {dimension_numbers = #tpu.dot_dimension_numbers<[1], [0], [0], [1], [0, 0, 1, 1], [], []>} : vector<8x32xbf16>, vector<32x128xbf16>, vector<8x128xf32> -> vector<8x128xf32>
    %48 = arith.addf %25, %47 : vector<8x128xf32>
    %49 = vector.extract_strided_slice %48 {offsets = [0, 0], sizes = [8, 96], strides = [1, 1]} : vector<8x128xf32> to vector<8x96xf32>
    %50 = arith.negf %49 : vector<8x96xf32>
    %51 = math.exp %50 : vector<8x96xf32>
    %cst_27 = arith.constant 1.000000e+00 : f32
    %52 = vector.broadcast %cst_27 : f32 to vector<8x96xf32>
    %53 = arith.addf %52, %51 : vector<8x96xf32>
    %54 = arith.divf %52, %53 : vector<8x96xf32>
    %55 = vector.extract_strided_slice %48 {offsets = [0, 96], sizes = [8, 32], strides = [1, 1]} : vector<8x128xf32> to vector<8x32xf32>
    %56 = math.tanh %55 : vector<8x32xf32>
    %57 = vector.extract_strided_slice %54 {offsets = [0, 0], sizes = [8, 32], strides = [1, 1]} : vector<8x96xf32> to vector<8x32xf32>
    %58 = vector.extract_strided_slice %54 {offsets = [0, 32], sizes = [8, 32], strides = [1, 1]} : vector<8x96xf32> to vector<8x32xf32>
    %59 = vector.extract_strided_slice %54 {offsets = [0, 64], sizes = [8, 32], strides = [1, 1]} : vector<8x96xf32> to vector<8x32xf32>
    %60 = arith.mulf %58, %42 : vector<8x32xf32>
    %61 = arith.mulf %57, %56 : vector<8x32xf32>
    %62 = arith.addf %60, %61 : vector<8x32xf32>
    %63 = math.tanh %62 : vector<8x32xf32>
    %64 = arith.mulf %59, %63 : vector<8x32xf32>
    %c8 = arith.constant 8 : index
    %c0_28 = arith.constant 0 : index
    %65 = vector.load %arg12[%c8, %c0_28] : memref<64x32xf32, #tpu.memory_space<vmem>>, vector<8x32xf32>
    tpu.vector_store %arg12[%c8, %c0_28], %64 {strides = array<i32>} : memref<64x32xf32, #tpu.memory_space<vmem>>, vector<8x32xf32>,
    %66 = arith.truncf %64 : vector<8x32xf32> to vector<8x32xbf16>
    %cst_29 = arith.constant dense<0.000000e+00> : vector<8x128xf32>
    %67 = tpu.matmul %66, %3, %cst_29 {dimension_numbers = #tpu.dot_dimension_numbers<[1], [0], [0], [1], [0, 0, 1, 1], [], []>} : vector<8x32xbf16>, vector<32x128xbf16>, vector<8x128xf32> -> vector<8x128xf32>
    %68 = arith.addf %25, %67 : vector<8x128xf32>
    %69 = vector.extract_strided_slice %68 {offsets = [0, 0], sizes = [8, 96], strides = [1, 1]} : vector<8x128xf32> to vector<8x96xf32>
    %70 = arith.negf %69 : vector<8x96xf32>
    %71 = math.exp %70 : vector<8x96xf32>
    %cst_30 = arith.constant 1.000000e+00 : f32
    %72 = vector.broadcast %cst_30 : f32 to vector<8x96xf32>
    %73 = arith.addf %72, %71 : vector<8x96xf32>
    %74 = arith.divf %72, %73 : vector<8x96xf32>
    %75 = vector.extract_strided_slice %68 {offsets = [0, 96], sizes = [8, 32], strides = [1, 1]} : vector<8x128xf32> to vector<8x32xf32>
    %76 = math.tanh %75 : vector<8x32xf32>
    %77 = vector.extract_strided_slice %74 {offsets = [0, 0], sizes = [8, 32], strides = [1, 1]} : vector<8x96xf32> to vector<8x32xf32>
    %78 = vector.extract_strided_slice %74 {offsets = [0, 32], sizes = [8, 32], strides = [1, 1]} : vector<8x96xf32> to vector<8x32xf32>
    %79 = vector.extract_strided_slice %74 {offsets = [0, 64], sizes = [8, 32], strides = [1, 1]} : vector<8x96xf32> to vector<8x32xf32>
    %80 = arith.mulf %78, %62 : vector<8x32xf32>
    %81 = arith.mulf %77, %76 : vector<8x32xf32>
    %82 = arith.addf %80, %81 : vector<8x32xf32>
    %83 = math.tanh %82 : vector<8x32xf32>
    %84 = arith.mulf %79, %83 : vector<8x32xf32>
    %c16 = arith.constant 16 : index
    %c0_31 = arith.constant 0 : index
    %85 = vector.load %arg12[%c16, %c0_31] : memref<64x32xf32, #tpu.memory_space<vmem>>, vector<8x32xf32>
    tpu.vector_store %arg12[%c16, %c0_31], %84 {strides = array<i32>} : memref<64x32xf32, #tpu.memory_space<vmem>>, vector<8x32xf32>,
    %86 = arith.truncf %84 : vector<8x32xf32> to vector<8x32xbf16>
    %cst_32 = arith.constant dense<0.000000e+00> : vector<8x128xf32>
    %87 = tpu.matmul %86, %3, %cst_32 {dimension_numbers = #tpu.dot_dimension_numbers<[1], [0], [0], [1], [0, 0, 1, 1], [], []>} : vector<8x32xbf16>, vector<32x128xbf16>, vector<8x128xf32> -> vector<8x128xf32>
    %88 = arith.addf %25, %87 : vector<8x128xf32>
    %89 = vector.extract_strided_slice %88 {offsets = [0, 0], sizes = [8, 96], strides = [1, 1]} : vector<8x128xf32> to vector<8x96xf32>
    %90 = arith.negf %89 : vector<8x96xf32>
    %91 = math.exp %90 : vector<8x96xf32>
    %cst_33 = arith.constant 1.000000e+00 : f32
    %92 = vector.broadcast %cst_33 : f32 to vector<8x96xf32>
    %93 = arith.addf %92, %91 : vector<8x96xf32>
    %94 = arith.divf %92, %93 : vector<8x96xf32>
    %95 = vector.extract_strided_slice %88 {offsets = [0, 96], sizes = [8, 32], strides = [1, 1]} : vector<8x128xf32> to vector<8x32xf32>
    %96 = math.tanh %95 : vector<8x32xf32>
    %97 = vector.extract_strided_slice %94 {offsets = [0, 0], sizes = [8, 32], strides = [1, 1]} : vector<8x96xf32> to vector<8x32xf32>
    %98 = vector.extract_strided_slice %94 {offsets = [0, 32], sizes = [8, 32], strides = [1, 1]} : vector<8x96xf32> to vector<8x32xf32>
    %99 = vector.extract_strided_slice %94 {offsets = [0, 64], sizes = [8, 32], strides = [1, 1]} : vector<8x96xf32> to vector<8x32xf32>
    %100 = arith.mulf %98, %82 : vector<8x32xf32>
    %101 = arith.mulf %97, %96 : vector<8x32xf32>
    %102 = arith.addf %100, %101 : vector<8x32xf32>
    %103 = math.tanh %102 : vector<8x32xf32>
    %104 = arith.mulf %99, %103 : vector<8x32xf32>
    %c24 = arith.constant 24 : index
    %c0_34 = arith.constant 0 : index
    %105 = vector.load %arg12[%c24, %c0_34] : memref<64x32xf32, #tpu.memory_space<vmem>>, vector<8x32xf32>
    tpu.vector_store %arg12[%c24, %c0_34], %104 {strides = array<i32>} : memref<64x32xf32, #tpu.memory_space<vmem>>, vector<8x32xf32>,
    %106 = arith.truncf %104 : vector<8x32xf32> to vector<8x32xbf16>
    %cst_35 = arith.constant dense<0.000000e+00> : vector<8x128xf32>
    %107 = tpu.matmul %106, %3, %cst_35 {dimension_numbers = #tpu.dot_dimension_numbers<[1], [0], [0], [1], [0, 0, 1, 1], [], []>} : vector<8x32xbf16>, vector<32x128xbf16>, vector<8x128xf32> -> vector<8x128xf32>
    %108 = arith.addf %25, %107 : vector<8x128xf32>
    %109 = vector.extract_strided_slice %108 {offsets = [0, 0], sizes = [8, 96], strides = [1, 1]} : vector<8x128xf32> to vector<8x96xf32>
    %110 = arith.negf %109 : vector<8x96xf32>
    %111 = math.exp %110 : vector<8x96xf32>
    %cst_36 = arith.constant 1.000000e+00 : f32
    %112 = vector.broadcast %cst_36 : f32 to vector<8x96xf32>
    %113 = arith.addf %112, %111 : vector<8x96xf32>
    %114 = arith.divf %112, %113 : vector<8x96xf32>
    %115 = vector.extract_strided_slice %108 {offsets = [0, 96], sizes = [8, 32], strides = [1, 1]} : vector<8x128xf32> to vector<8x32xf32>
    %116 = math.tanh %115 : vector<8x32xf32>
    %117 = vector.extract_strided_slice %114 {offsets = [0, 0], sizes = [8, 32], strides = [1, 1]} : vector<8x96xf32> to vector<8x32xf32>
    %118 = vector.extract_strided_slice %114 {offsets = [0, 32], sizes = [8, 32], strides = [1, 1]} : vector<8x96xf32> to vector<8x32xf32>
    %119 = vector.extract_strided_slice %114 {offsets = [0, 64], sizes = [8, 32], strides = [1, 1]} : vector<8x96xf32> to vector<8x32xf32>
    %120 = arith.mulf %118, %102 : vector<8x32xf32>
    %121 = arith.mulf %117, %116 : vector<8x32xf32>
    %122 = arith.addf %120, %121 : vector<8x32xf32>
    %123 = math.tanh %122 : vector<8x32xf32>
    %124 = arith.mulf %119, %123 : vector<8x32xf32>
    %c32 = arith.constant 32 : index
    %c0_37 = arith.constant 0 : index
    %125 = vector.load %arg12[%c32, %c0_37] : memref<64x32xf32, #tpu.memory_space<vmem>>, vector<8x32xf32>
    tpu.vector_store %arg12[%c32, %c0_37], %124 {strides = array<i32>} : memref<64x32xf32, #tpu.memory_space<vmem>>, vector<8x32xf32>,
    %126 = arith.truncf %124 : vector<8x32xf32> to vector<8x32xbf16>
    %cst_38 = arith.constant dense<0.000000e+00> : vector<8x128xf32>
    %127 = tpu.matmul %126, %3, %cst_38 {dimension_numbers = #tpu.dot_dimension_numbers<[1], [0], [0], [1], [0, 0, 1, 1], [], []>} : vector<8x32xbf16>, vector<32x128xbf16>, vector<8x128xf32> -> vector<8x128xf32>
    %128 = arith.addf %25, %127 : vector<8x128xf32>
    %129 = vector.extract_strided_slice %128 {offsets = [0, 0], sizes = [8, 96], strides = [1, 1]} : vector<8x128xf32> to vector<8x96xf32>
    %130 = arith.negf %129 : vector<8x96xf32>
    %131 = math.exp %130 : vector<8x96xf32>
    %cst_39 = arith.constant 1.000000e+00 : f32
    %132 = vector.broadcast %cst_39 : f32 to vector<8x96xf32>
    %133 = arith.addf %132, %131 : vector<8x96xf32>
    %134 = arith.divf %132, %133 : vector<8x96xf32>
    %135 = vector.extract_strided_slice %128 {offsets = [0, 96], sizes = [8, 32], strides = [1, 1]} : vector<8x128xf32> to vector<8x32xf32>
    %136 = math.tanh %135 : vector<8x32xf32>
    %137 = vector.extract_strided_slice %134 {offsets = [0, 0], sizes = [8, 32], strides = [1, 1]} : vector<8x96xf32> to vector<8x32xf32>
    %138 = vector.extract_strided_slice %134 {offsets = [0, 32], sizes = [8, 32], strides = [1, 1]} : vector<8x96xf32> to vector<8x32xf32>
    %139 = vector.extract_strided_slice %134 {offsets = [0, 64], sizes = [8, 32], strides = [1, 1]} : vector<8x96xf32> to vector<8x32xf32>
    %140 = arith.mulf %138, %122 : vector<8x32xf32>
    %141 = arith.mulf %137, %136 : vector<8x32xf32>
    %142 = arith.addf %140, %141 : vector<8x32xf32>
    %143 = math.tanh %142 : vector<8x32xf32>
    %144 = arith.mulf %139, %143 : vector<8x32xf32>
    %c40 = arith.constant 40 : index
    %c0_40 = arith.constant 0 : index
    %145 = vector.load %arg12[%c40, %c0_40] : memref<64x32xf32, #tpu.memory_space<vmem>>, vector<8x32xf32>
    tpu.vector_store %arg12[%c40, %c0_40], %144 {strides = array<i32>} : memref<64x32xf32, #tpu.memory_space<vmem>>, vector<8x32xf32>,
    %146 = arith.truncf %144 : vector<8x32xf32> to vector<8x32xbf16>
    %cst_41 = arith.constant dense<0.000000e+00> : vector<8x128xf32>
    %147 = tpu.matmul %146, %3, %cst_41 {dimension_numbers = #tpu.dot_dimension_numbers<[1], [0], [0], [1], [0, 0, 1, 1], [], []>} : vector<8x32xbf16>, vector<32x128xbf16>, vector<8x128xf32> -> vector<8x128xf32>
    %148 = arith.addf %25, %147 : vector<8x128xf32>
    %149 = vector.extract_strided_slice %148 {offsets = [0, 0], sizes = [8, 96], strides = [1, 1]} : vector<8x128xf32> to vector<8x96xf32>
    %150 = arith.negf %149 : vector<8x96xf32>
    %151 = math.exp %150 : vector<8x96xf32>
    %cst_42 = arith.constant 1.000000e+00 : f32
    %152 = vector.broadcast %cst_42 : f32 to vector<8x96xf32>
    %153 = arith.addf %152, %151 : vector<8x96xf32>
    %154 = arith.divf %152, %153 : vector<8x96xf32>
    %155 = vector.extract_strided_slice %148 {offsets = [0, 96], sizes = [8, 32], strides = [1, 1]} : vector<8x128xf32> to vector<8x32xf32>
    %156 = math.tanh %155 : vector<8x32xf32>
    %157 = vector.extract_strided_slice %154 {offsets = [0, 0], sizes = [8, 32], strides = [1, 1]} : vector<8x96xf32> to vector<8x32xf32>
    %158 = vector.extract_strided_slice %154 {offsets = [0, 32], sizes = [8, 32], strides = [1, 1]} : vector<8x96xf32> to vector<8x32xf32>
    %159 = vector.extract_strided_slice %154 {offsets = [0, 64], sizes = [8, 32], strides = [1, 1]} : vector<8x96xf32> to vector<8x32xf32>
    %160 = arith.mulf %158, %142 : vector<8x32xf32>
    %161 = arith.mulf %157, %156 : vector<8x32xf32>
    %162 = arith.addf %160, %161 : vector<8x32xf32>
    %163 = math.tanh %162 : vector<8x32xf32>
    %164 = arith.mulf %159, %163 : vector<8x32xf32>
    %c48 = arith.constant 48 : index
    %c0_43 = arith.constant 0 : index
    %165 = vector.load %arg12[%c48, %c0_43] : memref<64x32xf32, #tpu.memory_space<vmem>>, vector<8x32xf32>
    tpu.vector_store %arg12[%c48, %c0_43], %164 {strides = array<i32>} : memref<64x32xf32, #tpu.memory_space<vmem>>, vector<8x32xf32>,
    %166 = arith.truncf %164 : vector<8x32xf32> to vector<8x32xbf16>
    %cst_44 = arith.constant dense<0.000000e+00> : vector<8x128xf32>
    %167 = tpu.matmul %166, %3, %cst_44 {dimension_numbers = #tpu.dot_dimension_numbers<[1], [0], [0], [1], [0, 0, 1, 1], [], []>} : vector<8x32xbf16>, vector<32x128xbf16>, vector<8x128xf32> -> vector<8x128xf32>
    %168 = arith.addf %25, %167 : vector<8x128xf32>
    %169 = vector.extract_strided_slice %168 {offsets = [0, 0], sizes = [8, 96], strides = [1, 1]} : vector<8x128xf32> to vector<8x96xf32>
    %170 = arith.negf %169 : vector<8x96xf32>
    %171 = math.exp %170 : vector<8x96xf32>
    %cst_45 = arith.constant 1.000000e+00 : f32
    %172 = vector.broadcast %cst_45 : f32 to vector<8x96xf32>
    %173 = arith.addf %172, %171 : vector<8x96xf32>
    %174 = arith.divf %172, %173 : vector<8x96xf32>
    %175 = vector.extract_strided_slice %168 {offsets = [0, 96], sizes = [8, 32], strides = [1, 1]} : vector<8x128xf32> to vector<8x32xf32>
    %176 = math.tanh %175 : vector<8x32xf32>
    %177 = vector.extract_strided_slice %174 {offsets = [0, 0], sizes = [8, 32], strides = [1, 1]} : vector<8x96xf32> to vector<8x32xf32>
    %178 = vector.extract_strided_slice %174 {offsets = [0, 32], sizes = [8, 32], strides = [1, 1]} : vector<8x96xf32> to vector<8x32xf32>
    %179 = vector.extract_strided_slice %174 {offsets = [0, 64], sizes = [8, 32], strides = [1, 1]} : vector<8x96xf32> to vector<8x32xf32>
    %180 = arith.mulf %178, %162 : vector<8x32xf32>
    %181 = arith.mulf %177, %176 : vector<8x32xf32>
    %182 = arith.addf %180, %181 : vector<8x32xf32>
    %183 = math.tanh %182 : vector<8x32xf32>
    %184 = arith.mulf %179, %183 : vector<8x32xf32>
    %c56 = arith.constant 56 : index
    %c0_46 = arith.constant 0 : index
    %185 = vector.load %arg12[%c56, %c0_46] : memref<64x32xf32, #tpu.memory_space<vmem>>, vector<8x32xf32>
    tpu.vector_store %arg12[%c56, %c0_46], %184 {strides = array<i32>} : memref<64x32xf32, #tpu.memory_space<vmem>>, vector<8x32xf32>,
    %c0_47 = arith.constant 0 : index
    %c0_48 = arith.constant 0 : index
    %186 = vector.load %arg12[%c0_47, %c0_48] : memref<64x32xf32, #tpu.memory_space<vmem>>, vector<64x32xf32>
    %187 = arith.truncf %186 : vector<64x32xf32> to vector<64x32xbf16>
    %cst_49 = arith.constant dense<0.000000e+00> : vector<64x128xf32>
    %188 = tpu.matmul %187, %5, %cst_49 {dimension_numbers = #tpu.dot_dimension_numbers<[1], [0], [0], [1], [0, 0, 1, 1], [], []>} : vector<64x32xbf16>, vector<32x128xbf16>, vector<64x128xf32> -> vector<64x128xf32>
    %189 = vector.broadcast %7 : vector<1x128xf32> to vector<64x128xf32>
    %190 = arith.addf %188, %189 : vector<64x128xf32>
    %c0_50 = arith.constant 0 : index
    %c0_51 = arith.constant 0 : index
    %191 = vector.load %arg13[%c0_50, %c0_51] : memref<64x128xf32, #tpu.memory_space<vmem>>, vector<64x128xf32>
    tpu.vector_store %arg13[%c0_50, %c0_51], %190 {strides = array<i32>} : memref<64x128xf32, #tpu.memory_space<vmem>>, vector<64x128xf32>,
    %c0_52 = arith.constant 0 : index
    %c0_53 = arith.constant 0 : index
    %192 = vector.load %arg13[%c0_52, %c0_53] : memref<64x128xf32, #tpu.memory_space<vmem>>, vector<8x128xf32>
    %193 = arith.truncf %21 : vector<8x32xf32> to vector<8x32xbf16>
    %cst_54 = arith.constant dense<0.000000e+00> : vector<8x128xf32>
    %194 = tpu.matmul %193, %6, %cst_54 {dimension_numbers = #tpu.dot_dimension_numbers<[1], [0], [0], [1], [0, 0, 1, 1], [], []>} : vector<8x32xbf16>, vector<32x128xbf16>, vector<8x128xf32> -> vector<8x128xf32>
    %195 = arith.addf %192, %194 : vector<8x128xf32>
    %196 = vector.extract_strided_slice %195 {offsets = [0, 0], sizes = [8, 96], strides = [1, 1]} : vector<8x128xf32> to vector<8x96xf32>
    %197 = arith.negf %196 : vector<8x96xf32>
    %198 = math.exp %197 : vector<8x96xf32>
    %cst_55 = arith.constant 1.000000e+00 : f32
    %199 = vector.broadcast %cst_55 : f32 to vector<8x96xf32>
    %200 = arith.addf %199, %198 : vector<8x96xf32>
    %201 = arith.divf %199, %200 : vector<8x96xf32>
    %202 = vector.extract_strided_slice %195 {offsets = [0, 96], sizes = [8, 32], strides = [1, 1]} : vector<8x128xf32> to vector<8x32xf32>
    %203 = math.tanh %202 : vector<8x32xf32>
    %204 = vector.extract_strided_slice %201 {offsets = [0, 0], sizes = [8, 32], strides = [1, 1]} : vector<8x96xf32> to vector<8x32xf32>
    %205 = vector.extract_strided_slice %201 {offsets = [0, 32], sizes = [8, 32], strides = [1, 1]} : vector<8x96xf32> to vector<8x32xf32>
    %206 = vector.extract_strided_slice %201 {offsets = [0, 64], sizes = [8, 32], strides = [1, 1]} : vector<8x96xf32> to vector<8x32xf32>
    %207 = arith.mulf %205, %21 : vector<8x32xf32>
    %208 = arith.mulf %204, %203 : vector<8x32xf32>
    %209 = arith.addf %207, %208 : vector<8x32xf32>
    %210 = math.tanh %209 : vector<8x32xf32>
    %211 = arith.mulf %206, %210 : vector<8x32xf32>
    %c0_56 = arith.constant 0 : index
    %c0_57 = arith.constant 0 : index
    %212 = vector.load %arg12[%c0_56, %c0_57] : memref<64x32xf32, #tpu.memory_space<vmem>>, vector<8x32xf32>
    tpu.vector_store %arg12[%c0_56, %c0_57], %211 {strides = array<i32>} : memref<64x32xf32, #tpu.memory_space<vmem>>, vector<8x32xf32>,
    %c8_58 = arith.constant 8 : index
    %c0_59 = arith.constant 0 : index
    %213 = vector.load %arg13[%c8_58, %c0_59] : memref<64x128xf32, #tpu.memory_space<vmem>>, vector<8x128xf32>
    %214 = arith.truncf %211 : vector<8x32xf32> to vector<8x32xbf16>
    %cst_60 = arith.constant dense<0.000000e+00> : vector<8x128xf32>
    %215 = tpu.matmul %214, %6, %cst_60 {dimension_numbers = #tpu.dot_dimension_numbers<[1], [0], [0], [1], [0, 0, 1, 1], [], []>} : vector<8x32xbf16>, vector<32x128xbf16>, vector<8x128xf32> -> vector<8x128xf32>
    %216 = arith.addf %213, %215 : vector<8x128xf32>
    %217 = vector.extract_strided_slice %216 {offsets = [0, 0], sizes = [8, 96], strides = [1, 1]} : vector<8x128xf32> to vector<8x96xf32>
    %218 = arith.negf %217 : vector<8x96xf32>
    %219 = math.exp %218 : vector<8x96xf32>
    %cst_61 = arith.constant 1.000000e+00 : f32
    %220 = vector.broadcast %cst_61 : f32 to vector<8x96xf32>
    %221 = arith.addf %220, %219 : vector<8x96xf32>
    %222 = arith.divf %220, %221 : vector<8x96xf32>
    %223 = vector.extract_strided_slice %216 {offsets = [0, 96], sizes = [8, 32], strides = [1, 1]} : vector<8x128xf32> to vector<8x32xf32>
    %224 = math.tanh %223 : vector<8x32xf32>
    %225 = vector.extract_strided_slice %222 {offsets = [0, 0], sizes = [8, 32], strides = [1, 1]} : vector<8x96xf32> to vector<8x32xf32>
    %226 = vector.extract_strided_slice %222 {offsets = [0, 32], sizes = [8, 32], strides = [1, 1]} : vector<8x96xf32> to vector<8x32xf32>
    %227 = vector.extract_strided_slice %222 {offsets = [0, 64], sizes = [8, 32], strides = [1, 1]} : vector<8x96xf32> to vector<8x32xf32>
    %228 = arith.mulf %226, %209 : vector<8x32xf32>
    %229 = arith.mulf %225, %224 : vector<8x32xf32>
    %230 = arith.addf %228, %229 : vector<8x32xf32>
    %231 = math.tanh %230 : vector<8x32xf32>
    %232 = arith.mulf %227, %231 : vector<8x32xf32>
    %c8_62 = arith.constant 8 : index
    %c0_63 = arith.constant 0 : index
    %233 = vector.load %arg12[%c8_62, %c0_63] : memref<64x32xf32, #tpu.memory_space<vmem>>, vector<8x32xf32>
    tpu.vector_store %arg12[%c8_62, %c0_63], %232 {strides = array<i32>} : memref<64x32xf32, #tpu.memory_space<vmem>>, vector<8x32xf32>,
    %c16_64 = arith.constant 16 : index
    %c0_65 = arith.constant 0 : index
    %234 = vector.load %arg13[%c16_64, %c0_65] : memref<64x128xf32, #tpu.memory_space<vmem>>, vector<8x128xf32>
    %235 = arith.truncf %232 : vector<8x32xf32> to vector<8x32xbf16>
    %cst_66 = arith.constant dense<0.000000e+00> : vector<8x128xf32>
    %236 = tpu.matmul %235, %6, %cst_66 {dimension_numbers = #tpu.dot_dimension_numbers<[1], [0], [0], [1], [0, 0, 1, 1], [], []>} : vector<8x32xbf16>, vector<32x128xbf16>, vector<8x128xf32> -> vector<8x128xf32>
    %237 = arith.addf %234, %236 : vector<8x128xf32>
    %238 = vector.extract_strided_slice %237 {offsets = [0, 0], sizes = [8, 96], strides = [1, 1]} : vector<8x128xf32> to vector<8x96xf32>
    %239 = arith.negf %238 : vector<8x96xf32>
    %240 = math.exp %239 : vector<8x96xf32>
    %cst_67 = arith.constant 1.000000e+00 : f32
    %241 = vector.broadcast %cst_67 : f32 to vector<8x96xf32>
    %242 = arith.addf %241, %240 : vector<8x96xf32>
    %243 = arith.divf %241, %242 : vector<8x96xf32>
    %244 = vector.extract_strided_slice %237 {offsets = [0, 96], sizes = [8, 32], strides = [1, 1]} : vector<8x128xf32> to vector<8x32xf32>
    %245 = math.tanh %244 : vector<8x32xf32>
    %246 = vector.extract_strided_slice %243 {offsets = [0, 0], sizes = [8, 32], strides = [1, 1]} : vector<8x96xf32> to vector<8x32xf32>
    %247 = vector.extract_strided_slice %243 {offsets = [0, 32], sizes = [8, 32], strides = [1, 1]} : vector<8x96xf32> to vector<8x32xf32>
    %248 = vector.extract_strided_slice %243 {offsets = [0, 64], sizes = [8, 32], strides = [1, 1]} : vector<8x96xf32> to vector<8x32xf32>
    %249 = arith.mulf %247, %230 : vector<8x32xf32>
    %250 = arith.mulf %246, %245 : vector<8x32xf32>
    %251 = arith.addf %249, %250 : vector<8x32xf32>
    %252 = math.tanh %251 : vector<8x32xf32>
    %253 = arith.mulf %248, %252 : vector<8x32xf32>
    %c16_68 = arith.constant 16 : index
    %c0_69 = arith.constant 0 : index
    %254 = vector.load %arg12[%c16_68, %c0_69] : memref<64x32xf32, #tpu.memory_space<vmem>>, vector<8x32xf32>
    tpu.vector_store %arg12[%c16_68, %c0_69], %253 {strides = array<i32>} : memref<64x32xf32, #tpu.memory_space<vmem>>, vector<8x32xf32>,
    %c24_70 = arith.constant 24 : index
    %c0_71 = arith.constant 0 : index
    %255 = vector.load %arg13[%c24_70, %c0_71] : memref<64x128xf32, #tpu.memory_space<vmem>>, vector<8x128xf32>
    %256 = arith.truncf %253 : vector<8x32xf32> to vector<8x32xbf16>
    %cst_72 = arith.constant dense<0.000000e+00> : vector<8x128xf32>
    %257 = tpu.matmul %256, %6, %cst_72 {dimension_numbers = #tpu.dot_dimension_numbers<[1], [0], [0], [1], [0, 0, 1, 1], [], []>} : vector<8x32xbf16>, vector<32x128xbf16>, vector<8x128xf32> -> vector<8x128xf32>
    %258 = arith.addf %255, %257 : vector<8x128xf32>
    %259 = vector.extract_strided_slice %258 {offsets = [0, 0], sizes = [8, 96], strides = [1, 1]} : vector<8x128xf32> to vector<8x96xf32>
    %260 = arith.negf %259 : vector<8x96xf32>
    %261 = math.exp %260 : vector<8x96xf32>
    %cst_73 = arith.constant 1.000000e+00 : f32
    %262 = vector.broadcast %cst_73 : f32 to vector<8x96xf32>
    %263 = arith.addf %262, %261 : vector<8x96xf32>
    %264 = arith.divf %262, %263 : vector<8x96xf32>
    %265 = vector.extract_strided_slice %258 {offsets = [0, 96], sizes = [8, 32], strides = [1, 1]} : vector<8x128xf32> to vector<8x32xf32>
    %266 = math.tanh %265 : vector<8x32xf32>
    %267 = vector.extract_strided_slice %264 {offsets = [0, 0], sizes = [8, 32], strides = [1, 1]} : vector<8x96xf32> to vector<8x32xf32>
    %268 = vector.extract_strided_slice %264 {offsets = [0, 32], sizes = [8, 32], strides = [1, 1]} : vector<8x96xf32> to vector<8x32xf32>
    %269 = vector.extract_strided_slice %264 {offsets = [0, 64], sizes = [8, 32], strides = [1, 1]} : vector<8x96xf32> to vector<8x32xf32>
    %270 = arith.mulf %268, %251 : vector<8x32xf32>
    %271 = arith.mulf %267, %266 : vector<8x32xf32>
    %272 = arith.addf %270, %271 : vector<8x32xf32>
    %273 = math.tanh %272 : vector<8x32xf32>
    %274 = arith.mulf %269, %273 : vector<8x32xf32>
    %c24_74 = arith.constant 24 : index
    %c0_75 = arith.constant 0 : index
    %275 = vector.load %arg12[%c24_74, %c0_75] : memref<64x32xf32, #tpu.memory_space<vmem>>, vector<8x32xf32>
    tpu.vector_store %arg12[%c24_74, %c0_75], %274 {strides = array<i32>} : memref<64x32xf32, #tpu.memory_space<vmem>>, vector<8x32xf32>,
    %c32_76 = arith.constant 32 : index
    %c0_77 = arith.constant 0 : index
    %276 = vector.load %arg13[%c32_76, %c0_77] : memref<64x128xf32, #tpu.memory_space<vmem>>, vector<8x128xf32>
    %277 = arith.truncf %274 : vector<8x32xf32> to vector<8x32xbf16>
    %cst_78 = arith.constant dense<0.000000e+00> : vector<8x128xf32>
    %278 = tpu.matmul %277, %6, %cst_78 {dimension_numbers = #tpu.dot_dimension_numbers<[1], [0], [0], [1], [0, 0, 1, 1], [], []>} : vector<8x32xbf16>, vector<32x128xbf16>, vector<8x128xf32> -> vector<8x128xf32>
    %279 = arith.addf %276, %278 : vector<8x128xf32>
    %280 = vector.extract_strided_slice %279 {offsets = [0, 0], sizes = [8, 96], strides = [1, 1]} : vector<8x128xf32> to vector<8x96xf32>
    %281 = arith.negf %280 : vector<8x96xf32>
    %282 = math.exp %281 : vector<8x96xf32>
    %cst_79 = arith.constant 1.000000e+00 : f32
    %283 = vector.broadcast %cst_79 : f32 to vector<8x96xf32>
    %284 = arith.addf %283, %282 : vector<8x96xf32>
    %285 = arith.divf %283, %284 : vector<8x96xf32>
    %286 = vector.extract_strided_slice %279 {offsets = [0, 96], sizes = [8, 32], strides = [1, 1]} : vector<8x128xf32> to vector<8x32xf32>
    %287 = math.tanh %286 : vector<8x32xf32>
    %288 = vector.extract_strided_slice %285 {offsets = [0, 0], sizes = [8, 32], strides = [1, 1]} : vector<8x96xf32> to vector<8x32xf32>
    %289 = vector.extract_strided_slice %285 {offsets = [0, 32], sizes = [8, 32], strides = [1, 1]} : vector<8x96xf32> to vector<8x32xf32>
    %290 = vector.extract_strided_slice %285 {offsets = [0, 64], sizes = [8, 32], strides = [1, 1]} : vector<8x96xf32> to vector<8x32xf32>
    %291 = arith.mulf %289, %272 : vector<8x32xf32>
    %292 = arith.mulf %288, %287 : vector<8x32xf32>
    %293 = arith.addf %291, %292 : vector<8x32xf32>
    %294 = math.tanh %293 : vector<8x32xf32>
    %295 = arith.mulf %290, %294 : vector<8x32xf32>
    %c32_80 = arith.constant 32 : index
    %c0_81 = arith.constant 0 : index
    %296 = vector.load %arg12[%c32_80, %c0_81] : memref<64x32xf32, #tpu.memory_space<vmem>>, vector<8x32xf32>
    tpu.vector_store %arg12[%c32_80, %c0_81], %295 {strides = array<i32>} : memref<64x32xf32, #tpu.memory_space<vmem>>, vector<8x32xf32>,
    %c40_82 = arith.constant 40 : index
    %c0_83 = arith.constant 0 : index
    %297 = vector.load %arg13[%c40_82, %c0_83] : memref<64x128xf32, #tpu.memory_space<vmem>>, vector<8x128xf32>
    %298 = arith.truncf %295 : vector<8x32xf32> to vector<8x32xbf16>
    %cst_84 = arith.constant dense<0.000000e+00> : vector<8x128xf32>
    %299 = tpu.matmul %298, %6, %cst_84 {dimension_numbers = #tpu.dot_dimension_numbers<[1], [0], [0], [1], [0, 0, 1, 1], [], []>} : vector<8x32xbf16>, vector<32x128xbf16>, vector<8x128xf32> -> vector<8x128xf32>
    %300 = arith.addf %297, %299 : vector<8x128xf32>
    %301 = vector.extract_strided_slice %300 {offsets = [0, 0], sizes = [8, 96], strides = [1, 1]} : vector<8x128xf32> to vector<8x96xf32>
    %302 = arith.negf %301 : vector<8x96xf32>
    %303 = math.exp %302 : vector<8x96xf32>
    %cst_85 = arith.constant 1.000000e+00 : f32
    %304 = vector.broadcast %cst_85 : f32 to vector<8x96xf32>
    %305 = arith.addf %304, %303 : vector<8x96xf32>
    %306 = arith.divf %304, %305 : vector<8x96xf32>
    %307 = vector.extract_strided_slice %300 {offsets = [0, 96], sizes = [8, 32], strides = [1, 1]} : vector<8x128xf32> to vector<8x32xf32>
    %308 = math.tanh %307 : vector<8x32xf32>
    %309 = vector.extract_strided_slice %306 {offsets = [0, 0], sizes = [8, 32], strides = [1, 1]} : vector<8x96xf32> to vector<8x32xf32>
    %310 = vector.extract_strided_slice %306 {offsets = [0, 32], sizes = [8, 32], strides = [1, 1]} : vector<8x96xf32> to vector<8x32xf32>
    %311 = vector.extract_strided_slice %306 {offsets = [0, 64], sizes = [8, 32], strides = [1, 1]} : vector<8x96xf32> to vector<8x32xf32>
    %312 = arith.mulf %310, %293 : vector<8x32xf32>
    %313 = arith.mulf %309, %308 : vector<8x32xf32>
    %314 = arith.addf %312, %313 : vector<8x32xf32>
    %315 = math.tanh %314 : vector<8x32xf32>
    %316 = arith.mulf %311, %315 : vector<8x32xf32>
    %c40_86 = arith.constant 40 : index
    %c0_87 = arith.constant 0 : index
    %317 = vector.load %arg12[%c40_86, %c0_87] : memref<64x32xf32, #tpu.memory_space<vmem>>, vector<8x32xf32>
    tpu.vector_store %arg12[%c40_86, %c0_87], %316 {strides = array<i32>} : memref<64x32xf32, #tpu.memory_space<vmem>>, vector<8x32xf32>,
    %c48_88 = arith.constant 48 : index
    %c0_89 = arith.constant 0 : index
    %318 = vector.load %arg13[%c48_88, %c0_89] : memref<64x128xf32, #tpu.memory_space<vmem>>, vector<8x128xf32>
    %319 = arith.truncf %316 : vector<8x32xf32> to vector<8x32xbf16>
    %cst_90 = arith.constant dense<0.000000e+00> : vector<8x128xf32>
    %320 = tpu.matmul %319, %6, %cst_90 {dimension_numbers = #tpu.dot_dimension_numbers<[1], [0], [0], [1], [0, 0, 1, 1], [], []>} : vector<8x32xbf16>, vector<32x128xbf16>, vector<8x128xf32> -> vector<8x128xf32>
    %321 = arith.addf %318, %320 : vector<8x128xf32>
    %322 = vector.extract_strided_slice %321 {offsets = [0, 0], sizes = [8, 96], strides = [1, 1]} : vector<8x128xf32> to vector<8x96xf32>
    %323 = arith.negf %322 : vector<8x96xf32>
    %324 = math.exp %323 : vector<8x96xf32>
    %cst_91 = arith.constant 1.000000e+00 : f32
    %325 = vector.broadcast %cst_91 : f32 to vector<8x96xf32>
    %326 = arith.addf %325, %324 : vector<8x96xf32>
    %327 = arith.divf %325, %326 : vector<8x96xf32>
    %328 = vector.extract_strided_slice %321 {offsets = [0, 96], sizes = [8, 32], strides = [1, 1]} : vector<8x128xf32> to vector<8x32xf32>
    %329 = math.tanh %328 : vector<8x32xf32>
    %330 = vector.extract_strided_slice %327 {offsets = [0, 0], sizes = [8, 32], strides = [1, 1]} : vector<8x96xf32> to vector<8x32xf32>
    %331 = vector.extract_strided_slice %327 {offsets = [0, 32], sizes = [8, 32], strides = [1, 1]} : vector<8x96xf32> to vector<8x32xf32>
    %332 = vector.extract_strided_slice %327 {offsets = [0, 64], sizes = [8, 32], strides = [1, 1]} : vector<8x96xf32> to vector<8x32xf32>
    %333 = arith.mulf %331, %314 : vector<8x32xf32>
    %334 = arith.mulf %330, %329 : vector<8x32xf32>
    %335 = arith.addf %333, %334 : vector<8x32xf32>
    %336 = math.tanh %335 : vector<8x32xf32>
    %337 = arith.mulf %332, %336 : vector<8x32xf32>
    %c48_92 = arith.constant 48 : index
    %c0_93 = arith.constant 0 : index
    %338 = vector.load %arg12[%c48_92, %c0_93] : memref<64x32xf32, #tpu.memory_space<vmem>>, vector<8x32xf32>
    tpu.vector_store %arg12[%c48_92, %c0_93], %337 {strides = array<i32>} : memref<64x32xf32, #tpu.memory_space<vmem>>, vector<8x32xf32>,
    %c56_94 = arith.constant 56 : index
    %c0_95 = arith.constant 0 : index
    %339 = vector.load %arg13[%c56_94, %c0_95] : memref<64x128xf32, #tpu.memory_space<vmem>>, vector<8x128xf32>
    %340 = arith.truncf %337 : vector<8x32xf32> to vector<8x32xbf16>
    %cst_96 = arith.constant dense<0.000000e+00> : vector<8x128xf32>
    %341 = tpu.matmul %340, %6, %cst_96 {dimension_numbers = #tpu.dot_dimension_numbers<[1], [0], [0], [1], [0, 0, 1, 1], [], []>} : vector<8x32xbf16>, vector<32x128xbf16>, vector<8x128xf32> -> vector<8x128xf32>
    %342 = arith.addf %339, %341 : vector<8x128xf32>
    %343 = vector.extract_strided_slice %342 {offsets = [0, 0], sizes = [8, 96], strides = [1, 1]} : vector<8x128xf32> to vector<8x96xf32>
    %344 = arith.negf %343 : vector<8x96xf32>
    %345 = math.exp %344 : vector<8x96xf32>
    %cst_97 = arith.constant 1.000000e+00 : f32
    %346 = vector.broadcast %cst_97 : f32 to vector<8x96xf32>
    %347 = arith.addf %346, %345 : vector<8x96xf32>
    %348 = arith.divf %346, %347 : vector<8x96xf32>
    %349 = vector.extract_strided_slice %342 {offsets = [0, 96], sizes = [8, 32], strides = [1, 1]} : vector<8x128xf32> to vector<8x32xf32>
    %350 = math.tanh %349 : vector<8x32xf32>
    %351 = vector.extract_strided_slice %348 {offsets = [0, 0], sizes = [8, 32], strides = [1, 1]} : vector<8x96xf32> to vector<8x32xf32>
    %352 = vector.extract_strided_slice %348 {offsets = [0, 32], sizes = [8, 32], strides = [1, 1]} : vector<8x96xf32> to vector<8x32xf32>
    %353 = vector.extract_strided_slice %348 {offsets = [0, 64], sizes = [8, 32], strides = [1, 1]} : vector<8x96xf32> to vector<8x32xf32>
    %354 = arith.mulf %352, %335 : vector<8x32xf32>
    %355 = arith.mulf %351, %350 : vector<8x32xf32>
    %356 = arith.addf %354, %355 : vector<8x32xf32>
    %357 = math.tanh %356 : vector<8x32xf32>
    %358 = arith.mulf %353, %357 : vector<8x32xf32>
    %c56_98 = arith.constant 56 : index
    %c0_99 = arith.constant 0 : index
    %359 = vector.load %arg12[%c56_98, %c0_99] : memref<64x32xf32, #tpu.memory_space<vmem>>, vector<8x32xf32>
    tpu.vector_store %arg12[%c56_98, %c0_99], %358 {strides = array<i32>} : memref<64x32xf32, #tpu.memory_space<vmem>>, vector<8x32xf32>,
    %c0_100 = arith.constant 0 : index
    %c0_101 = arith.constant 0 : index
    %360 = vector.load %arg12[%c0_100, %c0_101] : memref<64x32xf32, #tpu.memory_space<vmem>>, vector<64x32xf32>
    %361 = arith.truncf %360 : vector<64x32xf32> to vector<64x32xbf16>
    %cst_102 = arith.constant dense<0.000000e+00> : vector<64x128xf32>
    %362 = tpu.matmul %361, %5, %cst_102 {dimension_numbers = #tpu.dot_dimension_numbers<[1], [0], [0], [1], [0, 0, 1, 1], [], []>} : vector<64x32xbf16>, vector<32x128xbf16>, vector<64x128xf32> -> vector<64x128xf32>
    %363 = vector.broadcast %7 : vector<1x128xf32> to vector<64x128xf32>
    %364 = arith.addf %362, %363 : vector<64x128xf32>
    %c0_103 = arith.constant 0 : index
    %c0_104 = arith.constant 0 : index
    %365 = vector.load %arg13[%c0_103, %c0_104] : memref<64x128xf32, #tpu.memory_space<vmem>>, vector<64x128xf32>
    tpu.vector_store %arg13[%c0_103, %c0_104], %364 {strides = array<i32>} : memref<64x128xf32, #tpu.memory_space<vmem>>, vector<64x128xf32>,
    %c0_105 = arith.constant 0 : index
    %c0_106 = arith.constant 0 : index
    %366 = vector.load %arg13[%c0_105, %c0_106] : memref<64x128xf32, #tpu.memory_space<vmem>>, vector<8x128xf32>
    %367 = arith.truncf %21 : vector<8x32xf32> to vector<8x32xbf16>
    %cst_107 = arith.constant dense<0.000000e+00> : vector<8x128xf32>
    %368 = tpu.matmul %367, %6, %cst_107 {dimension_numbers = #tpu.dot_dimension_numbers<[1], [0], [0], [1], [0, 0, 1, 1], [], []>} : vector<8x32xbf16>, vector<32x128xbf16>, vector<8x128xf32> -> vector<8x128xf32>
    %369 = arith.addf %366, %368 : vector<8x128xf32>
    %370 = vector.extract_strided_slice %369 {offsets = [0, 0], sizes = [8, 96], strides = [1, 1]} : vector<8x128xf32> to vector<8x96xf32>
    %371 = arith.negf %370 : vector<8x96xf32>
    %372 = math.exp %371 : vector<8x96xf32>
    %cst_108 = arith.constant 1.000000e+00 : f32
    %373 = vector.broadcast %cst_108 : f32 to vector<8x96xf32>
    %374 = arith.addf %373, %372 : vector<8x96xf32>
    %375 = arith.divf %373, %374 : vector<8x96xf32>
    %376 = vector.extract_strided_slice %369 {offsets = [0, 96], sizes = [8, 32], strides = [1, 1]} : vector<8x128xf32> to vector<8x32xf32>
    %377 = math.tanh %376 : vector<8x32xf32>
    %378 = vector.extract_strided_slice %375 {offsets = [0, 0], sizes = [8, 32], strides = [1, 1]} : vector<8x96xf32> to vector<8x32xf32>
    %379 = vector.extract_strided_slice %375 {offsets = [0, 32], sizes = [8, 32], strides = [1, 1]} : vector<8x96xf32> to vector<8x32xf32>
    %380 = vector.extract_strided_slice %375 {offsets = [0, 64], sizes = [8, 32], strides = [1, 1]} : vector<8x96xf32> to vector<8x32xf32>
    %381 = arith.mulf %379, %21 : vector<8x32xf32>
    %382 = arith.mulf %378, %377 : vector<8x32xf32>
    %383 = arith.addf %381, %382 : vector<8x32xf32>
    %384 = math.tanh %383 : vector<8x32xf32>
    %385 = arith.mulf %380, %384 : vector<8x32xf32>
    %c0_109 = arith.constant 0 : index
    %c0_110 = arith.constant 0 : index
    %386 = vector.load %arg12[%c0_109, %c0_110] : memref<64x32xf32, #tpu.memory_space<vmem>>, vector<8x32xf32>
    tpu.vector_store %arg12[%c0_109, %c0_110], %385 {strides = array<i32>} : memref<64x32xf32, #tpu.memory_space<vmem>>, vector<8x32xf32>,
    %c8_111 = arith.constant 8 : index
    %c0_112 = arith.constant 0 : index
    %387 = vector.load %arg13[%c8_111, %c0_112] : memref<64x128xf32, #tpu.memory_space<vmem>>, vector<8x128xf32>
    %388 = arith.truncf %385 : vector<8x32xf32> to vector<8x32xbf16>
    %cst_113 = arith.constant dense<0.000000e+00> : vector<8x128xf32>
    %389 = tpu.matmul %388, %6, %cst_113 {dimension_numbers = #tpu.dot_dimension_numbers<[1], [0], [0], [1], [0, 0, 1, 1], [], []>} : vector<8x32xbf16>, vector<32x128xbf16>, vector<8x128xf32> -> vector<8x128xf32>
    %390 = arith.addf %387, %389 : vector<8x128xf32>
    %391 = vector.extract_strided_slice %390 {offsets = [0, 0], sizes = [8, 96], strides = [1, 1]} : vector<8x128xf32> to vector<8x96xf32>
    %392 = arith.negf %391 : vector<8x96xf32>
    %393 = math.exp %392 : vector<8x96xf32>
    %cst_114 = arith.constant 1.000000e+00 : f32
    %394 = vector.broadcast %cst_114 : f32 to vector<8x96xf32>
    %395 = arith.addf %394, %393 : vector<8x96xf32>
    %396 = arith.divf %394, %395 : vector<8x96xf32>
    %397 = vector.extract_strided_slice %390 {offsets = [0, 96], sizes = [8, 32], strides = [1, 1]} : vector<8x128xf32> to vector<8x32xf32>
    %398 = math.tanh %397 : vector<8x32xf32>
    %399 = vector.extract_strided_slice %396 {offsets = [0, 0], sizes = [8, 32], strides = [1, 1]} : vector<8x96xf32> to vector<8x32xf32>
    %400 = vector.extract_strided_slice %396 {offsets = [0, 32], sizes = [8, 32], strides = [1, 1]} : vector<8x96xf32> to vector<8x32xf32>
    %401 = vector.extract_strided_slice %396 {offsets = [0, 64], sizes = [8, 32], strides = [1, 1]} : vector<8x96xf32> to vector<8x32xf32>
    %402 = arith.mulf %400, %383 : vector<8x32xf32>
    %403 = arith.mulf %399, %398 : vector<8x32xf32>
    %404 = arith.addf %402, %403 : vector<8x32xf32>
    %405 = math.tanh %404 : vector<8x32xf32>
    %406 = arith.mulf %401, %405 : vector<8x32xf32>
    %c8_115 = arith.constant 8 : index
    %c0_116 = arith.constant 0 : index
    %407 = vector.load %arg12[%c8_115, %c0_116] : memref<64x32xf32, #tpu.memory_space<vmem>>, vector<8x32xf32>
    tpu.vector_store %arg12[%c8_115, %c0_116], %406 {strides = array<i32>} : memref<64x32xf32, #tpu.memory_space<vmem>>, vector<8x32xf32>,
    %c16_117 = arith.constant 16 : index
    %c0_118 = arith.constant 0 : index
    %408 = vector.load %arg13[%c16_117, %c0_118] : memref<64x128xf32, #tpu.memory_space<vmem>>, vector<8x128xf32>
    %409 = arith.truncf %406 : vector<8x32xf32> to vector<8x32xbf16>
    %cst_119 = arith.constant dense<0.000000e+00> : vector<8x128xf32>
    %410 = tpu.matmul %409, %6, %cst_119 {dimension_numbers = #tpu.dot_dimension_numbers<[1], [0], [0], [1], [0, 0, 1, 1], [], []>} : vector<8x32xbf16>, vector<32x128xbf16>, vector<8x128xf32> -> vector<8x128xf32>
    %411 = arith.addf %408, %410 : vector<8x128xf32>
    %412 = vector.extract_strided_slice %411 {offsets = [0, 0], sizes = [8, 96], strides = [1, 1]} : vector<8x128xf32> to vector<8x96xf32>
    %413 = arith.negf %412 : vector<8x96xf32>
    %414 = math.exp %413 : vector<8x96xf32>
    %cst_120 = arith.constant 1.000000e+00 : f32
    %415 = vector.broadcast %cst_120 : f32 to vector<8x96xf32>
    %416 = arith.addf %415, %414 : vector<8x96xf32>
    %417 = arith.divf %415, %416 : vector<8x96xf32>
    %418 = vector.extract_strided_slice %411 {offsets = [0, 96], sizes = [8, 32], strides = [1, 1]} : vector<8x128xf32> to vector<8x32xf32>
    %419 = math.tanh %418 : vector<8x32xf32>
    %420 = vector.extract_strided_slice %417 {offsets = [0, 0], sizes = [8, 32], strides = [1, 1]} : vector<8x96xf32> to vector<8x32xf32>
    %421 = vector.extract_strided_slice %417 {offsets = [0, 32], sizes = [8, 32], strides = [1, 1]} : vector<8x96xf32> to vector<8x32xf32>
    %422 = vector.extract_strided_slice %417 {offsets = [0, 64], sizes = [8, 32], strides = [1, 1]} : vector<8x96xf32> to vector<8x32xf32>
    %423 = arith.mulf %421, %404 : vector<8x32xf32>
    %424 = arith.mulf %420, %419 : vector<8x32xf32>
    %425 = arith.addf %423, %424 : vector<8x32xf32>
    %426 = math.tanh %425 : vector<8x32xf32>
    %427 = arith.mulf %422, %426 : vector<8x32xf32>
    %c16_121 = arith.constant 16 : index
    %c0_122 = arith.constant 0 : index
    %428 = vector.load %arg12[%c16_121, %c0_122] : memref<64x32xf32, #tpu.memory_space<vmem>>, vector<8x32xf32>
    tpu.vector_store %arg12[%c16_121, %c0_122], %427 {strides = array<i32>} : memref<64x32xf32, #tpu.memory_space<vmem>>, vector<8x32xf32>,
    %c24_123 = arith.constant 24 : index
    %c0_124 = arith.constant 0 : index
    %429 = vector.load %arg13[%c24_123, %c0_124] : memref<64x128xf32, #tpu.memory_space<vmem>>, vector<8x128xf32>
    %430 = arith.truncf %427 : vector<8x32xf32> to vector<8x32xbf16>
    %cst_125 = arith.constant dense<0.000000e+00> : vector<8x128xf32>
    %431 = tpu.matmul %430, %6, %cst_125 {dimension_numbers = #tpu.dot_dimension_numbers<[1], [0], [0], [1], [0, 0, 1, 1], [], []>} : vector<8x32xbf16>, vector<32x128xbf16>, vector<8x128xf32> -> vector<8x128xf32>
    %432 = arith.addf %429, %431 : vector<8x128xf32>
    %433 = vector.extract_strided_slice %432 {offsets = [0, 0], sizes = [8, 96], strides = [1, 1]} : vector<8x128xf32> to vector<8x96xf32>
    %434 = arith.negf %433 : vector<8x96xf32>
    %435 = math.exp %434 : vector<8x96xf32>
    %cst_126 = arith.constant 1.000000e+00 : f32
    %436 = vector.broadcast %cst_126 : f32 to vector<8x96xf32>
    %437 = arith.addf %436, %435 : vector<8x96xf32>
    %438 = arith.divf %436, %437 : vector<8x96xf32>
    %439 = vector.extract_strided_slice %432 {offsets = [0, 96], sizes = [8, 32], strides = [1, 1]} : vector<8x128xf32> to vector<8x32xf32>
    %440 = math.tanh %439 : vector<8x32xf32>
    %441 = vector.extract_strided_slice %438 {offsets = [0, 0], sizes = [8, 32], strides = [1, 1]} : vector<8x96xf32> to vector<8x32xf32>
    %442 = vector.extract_strided_slice %438 {offsets = [0, 32], sizes = [8, 32], strides = [1, 1]} : vector<8x96xf32> to vector<8x32xf32>
    %443 = vector.extract_strided_slice %438 {offsets = [0, 64], sizes = [8, 32], strides = [1, 1]} : vector<8x96xf32> to vector<8x32xf32>
    %444 = arith.mulf %442, %425 : vector<8x32xf32>
    %445 = arith.mulf %441, %440 : vector<8x32xf32>
    %446 = arith.addf %444, %445 : vector<8x32xf32>
    %447 = math.tanh %446 : vector<8x32xf32>
    %448 = arith.mulf %443, %447 : vector<8x32xf32>
    %c24_127 = arith.constant 24 : index
    %c0_128 = arith.constant 0 : index
    %449 = vector.load %arg12[%c24_127, %c0_128] : memref<64x32xf32, #tpu.memory_space<vmem>>, vector<8x32xf32>
    tpu.vector_store %arg12[%c24_127, %c0_128], %448 {strides = array<i32>} : memref<64x32xf32, #tpu.memory_space<vmem>>, vector<8x32xf32>,
    %c32_129 = arith.constant 32 : index
    %c0_130 = arith.constant 0 : index
    %450 = vector.load %arg13[%c32_129, %c0_130] : memref<64x128xf32, #tpu.memory_space<vmem>>, vector<8x128xf32>
    %451 = arith.truncf %448 : vector<8x32xf32> to vector<8x32xbf16>
    %cst_131 = arith.constant dense<0.000000e+00> : vector<8x128xf32>
    %452 = tpu.matmul %451, %6, %cst_131 {dimension_numbers = #tpu.dot_dimension_numbers<[1], [0], [0], [1], [0, 0, 1, 1], [], []>} : vector<8x32xbf16>, vector<32x128xbf16>, vector<8x128xf32> -> vector<8x128xf32>
    %453 = arith.addf %450, %452 : vector<8x128xf32>
    %454 = vector.extract_strided_slice %453 {offsets = [0, 0], sizes = [8, 96], strides = [1, 1]} : vector<8x128xf32> to vector<8x96xf32>
    %455 = arith.negf %454 : vector<8x96xf32>
    %456 = math.exp %455 : vector<8x96xf32>
    %cst_132 = arith.constant 1.000000e+00 : f32
    %457 = vector.broadcast %cst_132 : f32 to vector<8x96xf32>
    %458 = arith.addf %457, %456 : vector<8x96xf32>
    %459 = arith.divf %457, %458 : vector<8x96xf32>
    %460 = vector.extract_strided_slice %453 {offsets = [0, 96], sizes = [8, 32], strides = [1, 1]} : vector<8x128xf32> to vector<8x32xf32>
    %461 = math.tanh %460 : vector<8x32xf32>
    %462 = vector.extract_strided_slice %459 {offsets = [0, 0], sizes = [8, 32], strides = [1, 1]} : vector<8x96xf32> to vector<8x32xf32>
    %463 = vector.extract_strided_slice %459 {offsets = [0, 32], sizes = [8, 32], strides = [1, 1]} : vector<8x96xf32> to vector<8x32xf32>
    %464 = vector.extract_strided_slice %459 {offsets = [0, 64], sizes = [8, 32], strides = [1, 1]} : vector<8x96xf32> to vector<8x32xf32>
    %465 = arith.mulf %463, %446 : vector<8x32xf32>
    %466 = arith.mulf %462, %461 : vector<8x32xf32>
    %467 = arith.addf %465, %466 : vector<8x32xf32>
    %468 = math.tanh %467 : vector<8x32xf32>
    %469 = arith.mulf %464, %468 : vector<8x32xf32>
    %c32_133 = arith.constant 32 : index
    %c0_134 = arith.constant 0 : index
    %470 = vector.load %arg12[%c32_133, %c0_134] : memref<64x32xf32, #tpu.memory_space<vmem>>, vector<8x32xf32>
    tpu.vector_store %arg12[%c32_133, %c0_134], %469 {strides = array<i32>} : memref<64x32xf32, #tpu.memory_space<vmem>>, vector<8x32xf32>,
    %c40_135 = arith.constant 40 : index
    %c0_136 = arith.constant 0 : index
    %471 = vector.load %arg13[%c40_135, %c0_136] : memref<64x128xf32, #tpu.memory_space<vmem>>, vector<8x128xf32>
    %472 = arith.truncf %469 : vector<8x32xf32> to vector<8x32xbf16>
    %cst_137 = arith.constant dense<0.000000e+00> : vector<8x128xf32>
    %473 = tpu.matmul %472, %6, %cst_137 {dimension_numbers = #tpu.dot_dimension_numbers<[1], [0], [0], [1], [0, 0, 1, 1], [], []>} : vector<8x32xbf16>, vector<32x128xbf16>, vector<8x128xf32> -> vector<8x128xf32>
    %474 = arith.addf %471, %473 : vector<8x128xf32>
    %475 = vector.extract_strided_slice %474 {offsets = [0, 0], sizes = [8, 96], strides = [1, 1]} : vector<8x128xf32> to vector<8x96xf32>
    %476 = arith.negf %475 : vector<8x96xf32>
    %477 = math.exp %476 : vector<8x96xf32>
    %cst_138 = arith.constant 1.000000e+00 : f32
    %478 = vector.broadcast %cst_138 : f32 to vector<8x96xf32>
    %479 = arith.addf %478, %477 : vector<8x96xf32>
    %480 = arith.divf %478, %479 : vector<8x96xf32>
    %481 = vector.extract_strided_slice %474 {offsets = [0, 96], sizes = [8, 32], strides = [1, 1]} : vector<8x128xf32> to vector<8x32xf32>
    %482 = math.tanh %481 : vector<8x32xf32>
    %483 = vector.extract_strided_slice %480 {offsets = [0, 0], sizes = [8, 32], strides = [1, 1]} : vector<8x96xf32> to vector<8x32xf32>
    %484 = vector.extract_strided_slice %480 {offsets = [0, 32], sizes = [8, 32], strides = [1, 1]} : vector<8x96xf32> to vector<8x32xf32>
    %485 = vector.extract_strided_slice %480 {offsets = [0, 64], sizes = [8, 32], strides = [1, 1]} : vector<8x96xf32> to vector<8x32xf32>
    %486 = arith.mulf %484, %467 : vector<8x32xf32>
    %487 = arith.mulf %483, %482 : vector<8x32xf32>
    %488 = arith.addf %486, %487 : vector<8x32xf32>
    %489 = math.tanh %488 : vector<8x32xf32>
    %490 = arith.mulf %485, %489 : vector<8x32xf32>
    %c40_139 = arith.constant 40 : index
    %c0_140 = arith.constant 0 : index
    %491 = vector.load %arg12[%c40_139, %c0_140] : memref<64x32xf32, #tpu.memory_space<vmem>>, vector<8x32xf32>
    tpu.vector_store %arg12[%c40_139, %c0_140], %490 {strides = array<i32>} : memref<64x32xf32, #tpu.memory_space<vmem>>, vector<8x32xf32>,
    %c48_141 = arith.constant 48 : index
    %c0_142 = arith.constant 0 : index
    %492 = vector.load %arg13[%c48_141, %c0_142] : memref<64x128xf32, #tpu.memory_space<vmem>>, vector<8x128xf32>
    %493 = arith.truncf %490 : vector<8x32xf32> to vector<8x32xbf16>
    %cst_143 = arith.constant dense<0.000000e+00> : vector<8x128xf32>
    %494 = tpu.matmul %493, %6, %cst_143 {dimension_numbers = #tpu.dot_dimension_numbers<[1], [0], [0], [1], [0, 0, 1, 1], [], []>} : vector<8x32xbf16>, vector<32x128xbf16>, vector<8x128xf32> -> vector<8x128xf32>
    %495 = arith.addf %492, %494 : vector<8x128xf32>
    %496 = vector.extract_strided_slice %495 {offsets = [0, 0], sizes = [8, 96], strides = [1, 1]} : vector<8x128xf32> to vector<8x96xf32>
    %497 = arith.negf %496 : vector<8x96xf32>
    %498 = math.exp %497 : vector<8x96xf32>
    %cst_144 = arith.constant 1.000000e+00 : f32
    %499 = vector.broadcast %cst_144 : f32 to vector<8x96xf32>
    %500 = arith.addf %499, %498 : vector<8x96xf32>
    %501 = arith.divf %499, %500 : vector<8x96xf32>
    %502 = vector.extract_strided_slice %495 {offsets = [0, 96], sizes = [8, 32], strides = [1, 1]} : vector<8x128xf32> to vector<8x32xf32>
    %503 = math.tanh %502 : vector<8x32xf32>
    %504 = vector.extract_strided_slice %501 {offsets = [0, 0], sizes = [8, 32], strides = [1, 1]} : vector<8x96xf32> to vector<8x32xf32>
    %505 = vector.extract_strided_slice %501 {offsets = [0, 32], sizes = [8, 32], strides = [1, 1]} : vector<8x96xf32> to vector<8x32xf32>
    %506 = vector.extract_strided_slice %501 {offsets = [0, 64], sizes = [8, 32], strides = [1, 1]} : vector<8x96xf32> to vector<8x32xf32>
    %507 = arith.mulf %505, %488 : vector<8x32xf32>
    %508 = arith.mulf %504, %503 : vector<8x32xf32>
    %509 = arith.addf %507, %508 : vector<8x32xf32>
    %510 = math.tanh %509 : vector<8x32xf32>
    %511 = arith.mulf %506, %510 : vector<8x32xf32>
    %c48_145 = arith.constant 48 : index
    %c0_146 = arith.constant 0 : index
    %512 = vector.load %arg12[%c48_145, %c0_146] : memref<64x32xf32, #tpu.memory_space<vmem>>, vector<8x32xf32>
    tpu.vector_store %arg12[%c48_145, %c0_146], %511 {strides = array<i32>} : memref<64x32xf32, #tpu.memory_space<vmem>>, vector<8x32xf32>,
    %c56_147 = arith.constant 56 : index
    %c0_148 = arith.constant 0 : index
    %513 = vector.load %arg13[%c56_147, %c0_148] : memref<64x128xf32, #tpu.memory_space<vmem>>, vector<8x128xf32>
    %514 = arith.truncf %511 : vector<8x32xf32> to vector<8x32xbf16>
    %cst_149 = arith.constant dense<0.000000e+00> : vector<8x128xf32>
    %515 = tpu.matmul %514, %6, %cst_149 {dimension_numbers = #tpu.dot_dimension_numbers<[1], [0], [0], [1], [0, 0, 1, 1], [], []>} : vector<8x32xbf16>, vector<32x128xbf16>, vector<8x128xf32> -> vector<8x128xf32>
    %516 = arith.addf %513, %515 : vector<8x128xf32>
    %517 = vector.extract_strided_slice %516 {offsets = [0, 0], sizes = [8, 96], strides = [1, 1]} : vector<8x128xf32> to vector<8x96xf32>
    %518 = arith.negf %517 : vector<8x96xf32>
    %519 = math.exp %518 : vector<8x96xf32>
    %cst_150 = arith.constant 1.000000e+00 : f32
    %520 = vector.broadcast %cst_150 : f32 to vector<8x96xf32>
    %521 = arith.addf %520, %519 : vector<8x96xf32>
    %522 = arith.divf %520, %521 : vector<8x96xf32>
    %523 = vector.extract_strided_slice %516 {offsets = [0, 96], sizes = [8, 32], strides = [1, 1]} : vector<8x128xf32> to vector<8x32xf32>
    %524 = math.tanh %523 : vector<8x32xf32>
    %525 = vector.extract_strided_slice %522 {offsets = [0, 0], sizes = [8, 32], strides = [1, 1]} : vector<8x96xf32> to vector<8x32xf32>
    %526 = vector.extract_strided_slice %522 {offsets = [0, 32], sizes = [8, 32], strides = [1, 1]} : vector<8x96xf32> to vector<8x32xf32>
    %527 = vector.extract_strided_slice %522 {offsets = [0, 64], sizes = [8, 32], strides = [1, 1]} : vector<8x96xf32> to vector<8x32xf32>
    %528 = arith.mulf %526, %509 : vector<8x32xf32>
    %529 = arith.mulf %525, %524 : vector<8x32xf32>
    %530 = arith.addf %528, %529 : vector<8x32xf32>
    %531 = math.tanh %530 : vector<8x32xf32>
    %532 = arith.mulf %527, %531 : vector<8x32xf32>
    %c56_151 = arith.constant 56 : index
    %c0_152 = arith.constant 0 : index
    %533 = vector.load %arg12[%c56_151, %c0_152] : memref<64x32xf32, #tpu.memory_space<vmem>>, vector<8x32xf32>
    tpu.vector_store %arg12[%c56_151, %c0_152], %532 {strides = array<i32>} : memref<64x32xf32, #tpu.memory_space<vmem>>, vector<8x32xf32>,
    %c0_153 = arith.constant 0 : index
    %c0_154 = arith.constant 0 : index
    %534 = vector.load %arg12[%c0_153, %c0_154] : memref<64x32xf32, #tpu.memory_space<vmem>>, vector<64x32xf32>
    %535 = arith.truncf %534 : vector<64x32xf32> to vector<64x32xbf16>
    %c0_155 = arith.constant 0 : index
    %c0_156 = arith.constant 0 : index
    %536 = vector.load %arg9[%c0_155, %c0_156] : memref<32x1xbf16, #tpu.memory_space<vmem>>, vector<32x1xbf16>
    %cst_157 = arith.constant dense<0.000000e+00> : vector<64x1xf32>
    %537 = tpu.matmul %535, %536, %cst_157 {dimension_numbers = #tpu.dot_dimension_numbers<[1], [0], [0], [1], [0, 0, 1, 1], [], []>} : vector<64x32xbf16>, vector<32x1xbf16>, vector<64x1xf32> -> vector<64x1xf32>
    %c0_158 = arith.constant 0 : index
    %c0_159 = arith.constant 0 : index
    %538 = vector.load %arg10[%c0_158, %c0_159] : memref<1x1xf32, #tpu.memory_space<vmem>>, vector<1x1xf32>
    %539 = vector.broadcast %538 : vector<1x1xf32> to vector<64x1xf32>
    %540 = arith.addf %537, %539 : vector<64x1xf32>
    %c0_160 = arith.constant 0 : index
    %c0_161 = arith.constant 0 : index
    %541 = vector.load %arg11[%c0_160, %c0_161] : memref<64x1xf32, #tpu.memory_space<vmem>>, vector<64x1xf32>
    tpu.vector_store %arg11[%c0_160, %c0_161], %540 {strides = array<i32>} : memref<64x1xf32, #tpu.memory_space<vmem>>, vector<64x1xf32>,
    return
  }
}

</mosaic_0001>

<llo_original>
// kernel: tpu_custom_call.1
$region0: #{tpu_custom_call.1}
  #allocation0 [shape = 'u32[]', space=smem, size = 0x4, offset = 0x4, fixed_abs, tag = 'smem constant byte address 0x4 - core index']
  #allocation1 [shape = 'u32[72,128]{1,0:T(1,128)}', space=vmem, size = 0x9000, scoped, tag = 'internal scratch']
  #allocation2 [shape = 'f32[64,32]{1,0:T(8,128)}', space=vmem, size = 0x8000, scoped, tag = 'scratch operand']
  #allocation3 [shape = 'f32[64,128]{1,0:T(8,128)}', space=vmem, size = 0x8000, scoped, tag = 'scratch operand']
  #allocation4 [shape = 'f32[1,1]{1,0:T(1,128)S(1)}', space=vmem, size = 0x200, scoped, tag = 'scoped memory for tpu_custom_call.1']
  %s0 = inlined_call_operand.hbm [shape: f32[8,32], index: 0, kind: input, shape index: {}]
  %s1 = inlined_call_operand.vmem [shape: bf16[32,32], index: 1, kind: input, shape index: {}]
  %s2 = inlined_call_operand.vmem [shape: f32[1,32], index: 2, kind: input, shape index: {}]
  %s3 = inlined_call_operand.hbm [shape: bf16[32,128], index: 3, kind: input, shape index: {}]
  %s4 = inlined_call_operand.hbm [shape: bf16[32,128], index: 4, kind: input, shape index: {}]
  %s5 = inlined_call_operand.vmem [shape: f32[1,128], index: 5, kind: input, shape index: {}]
  %s6 = inlined_call_operand.hbm [shape: bf16[32,128], index: 6, kind: input, shape index: {}]
  %s7 = inlined_call_operand.hbm [shape: bf16[32,128], index: 7, kind: input, shape index: {}]
  %s8 = inlined_call_operand.vmem [shape: f32[1,128], index: 8, kind: input, shape index: {}]
  %s9 = inlined_call_operand.vmem [shape: bf16[32,1], index: 9, kind: input, shape index: {}]
  %s10 = inlined_call_operand.<no memory space> [shape: f32[1,1], index: 10, kind: input, shape index: {}]
  %s11 = inlined_call_operand.vmem [shape: f32[64,1], index: 11, kind: output, shape index: {}]
  %s12 = sld [smem:[#allocation0]]
  $region74: #{tpu_custom_call.1} parent=0
    _
  %s14 = ssub.s32 1, %s12
  %s15 = scalar_select 0, %s14, %s12
  %v16 = vstv %s10
  %17 = vst [vmem:[#allocation4] sm:$0x1] %v16
  $region1: #{tpu_custom_call.1} parent=0
    #allocation5 [shape = 'u8[4096]{0}', space=vmem, size = 0x1000, scoped, tag = 'input window, operand 0, single buffered']
    #allocation6 [shape = 's32[1]{0}', space=sflag, size = 0x4, scoped, tag = 'scoped memory for tpu_custom_call.1']
    #allocation7 [shape = 'u8[8192]{0}', space=vmem, size = 0x2000, scoped, tag = 'input window, operand 3, single buffered']
    #allocation8 [shape = 's32[1]{0}', space=sflag, size = 0x4, scoped, tag = 'scoped memory for tpu_custom_call.1']
    #allocation9 [shape = 'u8[8192]{0}', space=vmem, size = 0x2000, scoped, tag = 'input window, operand 4, single buffered']
    #allocation10 [shape = 'u8[8192]{0}', space=vmem, size = 0x2000, scoped, tag = 'input window, operand 6, single buffered']
    #allocation11 [shape = 's32[1]{0}', space=sflag, size = 0x4, scoped, tag = 'scoped memory for tpu_custom_call.1']
    #allocation12 [shape = 'u8[8192]{0}', space=vmem, size = 0x2000, scoped, tag = 'input window, operand 7, single buffered']
    %18 = vsyncpa [#allocation6], 0
    %19 = vsyncpa [#allocation8], 0
    %20 = vsyncpa [#allocation11], 0
    // Predicated region
    $region2: #{tpu_custom_call.1} parent=1 // pred_check
      _
    $region3: #{tpu_custom_call.1} parent=1 // pred_check_branch
      %22 = sbr.rel (0) target = $region5
    $region4: #{tpu_custom_call.1} parent=1 // pred_region
      %24 = vsyncadd [#allocation6], 0
      %s26 = sshll.u32 %s0, 4
      %s27 = int_to_ptr.hbm [resolvable:$true] %s26
      %s28 = sshll.u32 [#allocation5], 4
      %s29 = int_to_ptr.vmem [resolvable:$true] %s28
      %31 = dma.hbm_to_vmem [thread:$0]  %s27, 128, %s29, [#allocation6]
    $region5: #{tpu_custom_call.1} parent=1 // pred_fallthru
      _
    // Predicated region
    $region6: #{tpu_custom_call.1} parent=1 // pred_check
      _
    $region7: #{tpu_custom_call.1} parent=1 // pred_check_branch
      %33 = sbr.rel (0) target = $region9
    $region8: #{tpu_custom_call.1} parent=1 // pred_region
      _
    $region9: #{tpu_custom_call.1} parent=1 // pred_fallthru
      _
    // Predicated region
    $region10: #{tpu_custom_call.1} parent=1 // pred_check
      _
    $region11: #{tpu_custom_call.1} parent=1 // pred_check_branch
      %35 = sbr.rel (0) target = $region13
    $region12: #{tpu_custom_call.1} parent=1 // pred_region
      _
    $region13: #{tpu_custom_call.1} parent=1 // pred_fallthru
      _
    // Predicated region
    $region14: #{tpu_custom_call.1} parent=1 // pred_check
      _
    $region15: #{tpu_custom_call.1} parent=1 // pred_check_branch
      %37 = sbr.rel (0) target = $region17
    $region16: #{tpu_custom_call.1} parent=1 // pred_region
      %39 = vsyncadd [#allocation8], 0
      %s40 = sshll.u32 %s3, 4
      %s41 = int_to_ptr.hbm [resolvable:$true] %s40
      %s42 = sshll.u32 [#allocation7], 4
      %s43 = int_to_ptr.vmem [resolvable:$true] %s42
      %48 = dma.hbm_to_vmem [thread:$0]  %s41, 256, %s43, [#allocation8], 64, 64, 4
    $region17: #{tpu_custom_call.1} parent=1 // pred_fallthru
      _
    // Predicated region
    $region18: #{tpu_custom_call.1} parent=1 // pred_check
      _
    $region19: #{tpu_custom_call.1} parent=1 // pred_check_branch
      %50 = sbr.rel (0) target = $region21
    $region20: #{tpu_custom_call.1} parent=1 // pred_region
      %52 = vsyncadd [#allocation8], 0
      %s53 = sshll.u32 %s4, 4
      %s54 = int_to_ptr.hbm [resolvable:$true] %s53
      %s55 = sshll.u32 [#allocation9], 4
      %s56 = int_to_ptr.vmem [resolvable:$true] %s55
      %61 = dma.hbm_to_vmem [thread:$0]  %s54, 256, %s56, [#allocation8], 64, 64, 4
    $region21: #{tpu_custom_call.1} parent=1 // pred_fallthru
      _
    // Predicated region
    $region22: #{tpu_custom_call.1} parent=1 // pred_check
      _
    $region23: #{tpu_custom_call.1} parent=1 // pred_check_branch
      %63 = sbr.rel (0) target = $region25
    $region24: #{tpu_custom_call.1} parent=1 // pred_region
      _
    $region25: #{tpu_custom_call.1} parent=1 // pred_fallthru
      _
    // Predicated region
    $region26: #{tpu_custom_call.1} parent=1 // pred_check
      _
    $region27: #{tpu_custom_call.1} parent=1 // pred_check_branch
      %65 = sbr.rel (0) target = $region29
    $region28: #{tpu_custom_call.1} parent=1 // pred_region
      %67 = vsyncadd [#allocation11], 0
      %s68 = sshll.u32 %s6, 4
      %s69 = int_to_ptr.hbm [resolvable:$true] %s68
      %s70 = sshll.u32 [#allocation10], 4
      %s71 = int_to_ptr.vmem [resolvable:$true] %s70
      %76 = dma.hbm_to_vmem [thread:$0]  %s69, 256, %s71, [#allocation11], 64, 64, 4
    $region29: #{tpu_custom_call.1} parent=1 // pred_fallthru
      _
    // Predicated region
    $region30: #{tpu_custom_call.1} parent=1 // pred_check
      _
    $region31: #{tpu_custom_call.1} parent=1 // pred_check_branch
      %78 = sbr.rel (0) target = $region33
    $region32: #{tpu_custom_call.1} parent=1 // pred_region
      %80 = vsyncadd [#allocation11], 0
      %s81 = sshll.u32 %s7, 4
      %s82 = int_to_ptr.hbm [resolvable:$true] %s81
      %s83 = sshll.u32 [#allocation12], 4
      %s84 = int_to_ptr.vmem [resolvable:$true] %s83
      %89 = dma.hbm_to_vmem [thread:$0]  %s82, 256, %s84, [#allocation11], 64, 64, 4
    $region33: #{tpu_custom_call.1} parent=1 // pred_fallthru
      _
    // Predicated region
    $region34: #{tpu_custom_call.1} parent=1 // pred_check
      _
    $region35: #{tpu_custom_call.1} parent=1 // pred_check_branch
      %91 = sbr.rel (0) target = $region37
    $region36: #{tpu_custom_call.1} parent=1 // pred_region
      _
    $region37: #{tpu_custom_call.1} parent=1 // pred_fallthru
      _
    // Predicated region
    $region38: #{tpu_custom_call.1} parent=1 // pred_check
      _
    $region39: #{tpu_custom_call.1} parent=1 // pred_check_branch
      %93 = sbr.rel (0) target = $region41
    $region40: #{tpu_custom_call.1} parent=1 // pred_region
      _
    $region41: #{tpu_custom_call.1} parent=1 // pred_fallthru
      _
    // Predicated region
    $region42: #{tpu_custom_call.1} parent=1 // pred_check
      _
    $region43: #{tpu_custom_call.1} parent=1 // pred_check_branch
      %95 = sbr.rel (0) target = $region45
    $region44: #{tpu_custom_call.1} parent=1 // pred_region
      _
    $region45: #{tpu_custom_call.1} parent=1 // pred_fallthru
      _
    // Predicated region
    $region46: #{tpu_custom_call.1} parent=1 // pred_check
      _
    $region47: #{tpu_custom_call.1} parent=1 // pred_check_branch
      %97 = sbr.rel (0) target = $region49
    $region48: #{tpu_custom_call.1} parent=1 // pred_region
      %99 = dma.done [#allocation6], 128
    $region49: #{tpu_custom_call.1} parent=1 // pred_fallthru
      _
    // Predicated region
    $region50: #{tpu_custom_call.1} parent=1 // pred_check
      _
    $region51: #{tpu_custom_call.1} parent=1 // pred_check_branch
      %101 = sbr.rel (0) target = $region53
    $region52: #{tpu_custom_call.1} parent=1 // pred_region
      %103 = dma.done [#allocation8], 256
    $region53: #{tpu_custom_call.1} parent=1 // pred_fallthru
      _
    // Predicated region
    $region54: #{tpu_custom_call.1} parent=1 // pred_check
      _
    $region55: #{tpu_custom_call.1} parent=1 // pred_check_branch
      %105 = sbr.rel (0) target = $region57
    $region56: #{tpu_custom_call.1} parent=1 // pred_region
      %107 = dma.done [#allocation8], 256
    $region57: #{tpu_custom_call.1} parent=1 // pred_fallthru
      _
    // Predicated region
    $region58: #{tpu_custom_call.1} parent=1 // pred_check
      _
    $region59: #{tpu_custom_call.1} parent=1 // pred_check_branch
      %109 = sbr.rel (0) target = $region61
    $region60: #{tpu_custom_call.1} parent=1 // pred_region
      %111 = dma.done [#allocation11], 256
    $region61: #{tpu_custom_call.1} parent=1 // pred_fallthru
      _
    // Predicated region
    $region62: #{tpu_custom_call.1} parent=1 // pred_check
      _
    $region63: #{tpu_custom_call.1} parent=1 // pred_check_branch
      %113 = sbr.rel (0) target = $region65
    $region64: #{tpu_custom_call.1} parent=1 // pred_region
      %115 = dma.done [#allocation11], 256
    $region65: #{tpu_custom_call.1} parent=1 // pred_fallthru
      _
    %v117 = vld [vmem:[%s1] sm:$0xf]
    %v118 = vld [vmem:[%s1 + $0x4] sm:$0xf]
    %v119 = vld [vmem:[%s1 + $0x8] sm:$0xf]
    %v120 = vld [vmem:[%s1 + $0xc] sm:$0xf]
    %v121 = vld [vmem:[%s2] sm:$0x1]
    %v122 = vld [vmem:[#allocation7] sm:$0xf]
    %v123 = vld [vmem:[#allocation7 + $0x4] sm:$0xf]
    %v124 = vld [vmem:[#allocation7 + $0x8] sm:$0xf]
    %v125 = vld [vmem:[#allocation7 + $0xc] sm:$0xf]
    %v126 = vld [vmem:[#allocation9] sm:$0xf]
    %v127 = vld [vmem:[#allocation9 + $0x4] sm:$0xf]
    %v128 = vld [vmem:[#allocation9 + $0x8] sm:$0xf]
    %v129 = vld [vmem:[#allocation9 + $0xc] sm:$0xf]
    %v130 = vld [vmem:[%s5] sm:$0x1]
    %v131 = vld [vmem:[#allocation10] sm:$0xf]
    %v132 = vld [vmem:[#allocation10 + $0x4] sm:$0xf]
    %v133 = vld [vmem:[#allocation10 + $0x8] sm:$0xf]
    %v134 = vld [vmem:[#allocation10 + $0xc] sm:$0xf]
    %v135 = vld [vmem:[#allocation12] sm:$0xf]
    %v136 = vld [vmem:[#allocation12 + $0x4] sm:$0xf]
    %v137 = vld [vmem:[#allocation12 + $0x8] sm:$0xf]
    %v138 = vld [vmem:[#allocation12 + $0xc] sm:$0xf]
    %v139 = vld [vmem:[%s8] sm:$0x1]
    %v140 = vld [vmem:[#allocation5] sm:$0xff]
    %v141 = vpack.c.bf16 %v140, %v140
    %v143 = vperm.slane %v121, 0
    %v149 = vunpack.c.l.b16 %v117
    %v150 = vunpack.c.l.b16 %v118
    %v151 = vunpack.c.l.b16 %v119
    %v152 = vunpack.c.l.b16 %v120
    %v153 = vpack.c.b16 %v150, %v149
    %v154 = vpack.c.b16 %v152, %v151
    %vm157 = vcmask 261120
    %v159 = vsel %vm157, %v141, 0
    %161 = vmatpush.bf16.msra.mxu0 0
    %162 = vmatpush.bf16.msra.mxu0 0
    %163 = vmatpush.bf16.msra.mxu0 0
    %164 = vmatpush.bf16.msra.mxu0 0
    %165 = vmatpush.bf16.msra.mxu0 0
    %166 = vmatpush.bf16.msra.mxu0 0
    %167 = vmatpush.bf16.msra.mxu0 %v154
    %168 = vmatpush.bf16.msra.mxu0 %v153
    %169 = vmatmul.bf16.gmra.mxu0 %v159
    %v170 = vpop.f32.mrf.mxu0
    %v171 = vadd.f32 %v143, %v170
    %v172 = vpop.f32.mrf.mxu0
    %173 = vdwg.mxu0
    %v174 = vmax.f32 %v171, 0.0
    %v175 = vpack.c.bf16 %v174, %v174
    %v177 = vsel %vm157, %v175, 0
    %179 = vmatpush.bf16.msra.mxu0 0
    %180 = vmatpush.bf16.msra.mxu0 0
    %181 = vmatpush.bf16.msra.mxu0 0
    %182 = vmatpush.bf16.msra.mxu0 0
    %183 = vmatpush.bf16.msra.mxu0 0
    %184 = vmatpush.bf16.msra.mxu0 0
    %185 = vmatpush.bf16.msra.mxu0 %v154
    %186 = vmatpush.bf16.msra.mxu0 %v153
    %187 = vmatmul.bf16.gmra.mxu0 %v177
    %v188 = vpop.f32.mrf.mxu0
    %v189 = vadd.f32 %v143, %v188
    %v190 = vpop.f32.mrf.mxu0
    %191 = vdwg.mxu0
    %v192 = vmax.f32 %v189, 0.0
    %v193 = vpack.c.bf16 %v192, %v192
    %v195 = vperm.slane %v130, 0
    %v201 = vunpack.c.l.b16 %v122
    %v202 = vunpack.c.l.b16 %v123
    %v203 = vunpack.c.l.b16 %v124
    %v204 = vunpack.c.l.b16 %v125
    %v205 = vpack.c.b16 %v202, %v201
    %v206 = vpack.c.b16 %v204, %v203
    %v210 = vsel %vm157, %v193, 0
    %212 = vmatpush.bf16.msra.mxu0 0
    %213 = vmatpush.bf16.msra.mxu0 0
    %214 = vmatpush.bf16.msra.mxu0 0
    %215 = vmatpush.bf16.msra.mxu0 0
    %216 = vmatpush.bf16.msra.mxu0 0
    %217 = vmatpush.bf16.msra.mxu0 0
    %218 = vmatpush.bf16.msra.mxu0 %v206
    %219 = vmatpush.bf16.msra.mxu0 %v205
    %220 = vmatmul.bf16.gmra.mxu0 %v210
    %v221 = vpop.f32.mrf.mxu0
    %v222 = vadd.f32 %v195, %v221
    %v223 = vpop.f32.mrf.mxu0
    %224 = vdwg.mxu0
    %v229 = vunpack.c.l.b16 %v126
    %v230 = vunpack.c.l.b16 %v127
    %v231 = vunpack.c.l.b16 %v128
    %v232 = vunpack.c.l.b16 %v129
    %v233 = vpack.c.b16 %v230, %v229
    %v234 = vpack.c.b16 %v232, %v231
    %v238 = vsel %vm157, 0, 0
    %240 = vmatpush.bf16.msra.mxu0 0
    %241 = vmatpush.bf16.msra.mxu0 0
    %242 = vmatpush.bf16.msra.mxu0 0
    %243 = vmatpush.bf16.msra.mxu0 0
    %244 = vmatpush.bf16.msra.mxu0 0
    %245 = vmatpush.bf16.msra.mxu0 0
    %246 = vmatpush.bf16.msra.mxu0 %v234
    %247 = vmatpush.bf16.msra.mxu0 %v233
    %248 = vmatmul.bf16.gmra.mxu0 %v238
    %v249 = vpop.f32.mrf.mxu0
    %v250 = vadd.f32 0.0, %v249
    %v251 = vpop.f32.mrf.mxu0
    %252 = vdwg.mxu0
    %v253 = vadd.f32 %v222, %v250
    %v254 = vxor.u32 %v253, 2147483648
    %v255 = vmul.f32 %v254, 1.442695
    %v256 = vpow.pop %v255
    %v257 = vadd.f32 %v256, 1.0
    %v258 = vrcp.pop %v257
    %v259 = vmul.f32 %v257, %v258
    %v260 = vsub.f32 1.0, %v259
    %v261 = vmul.f32 %v258, %v260
    %v262 = vadd.f32 %v258, %v261
    %vm263 = vweird.f32 %v257
    %vm264 = vweird.f32 %v258
    %vm265 = vmor %vm263, %vm264
    %v266 = vsel %vm265, %v258, %v262
    %v267 = vand.u32 2147483647, %v257
    %vm268 = vcmp.eq.f32.partialorder %v267, 8.507059e+37
    %v269 = vand.u32 %v257, 2147483648
    %v270 = vor.u32 1.1754944e-38, %v269
    %v271 = vsel %vm268, %v270, %v266
    %v272 = vmul.f32 1.0, %v271
    %v273 = vtanh.pop %v253
    %v274 = vmul.f32 %v272, 0.0
    %276 = vrot.lane.b32.xlu0 %v273, 32
    %v277 = vpop.permute.xlu0 %276
    %v279 = vmul.f32 %v272, %v277
    %281 = vrot.lane.b32.xlu0 %v279, 32
    %v282 = vpop.permute.xlu0 %281
    %v284 = vadd.f32 %v274, %v282
    %v285 = vtanh.pop %v284
    %287 = vrot.lane.b32.xlu0 %v285, 32
    %v288 = vpop.permute.xlu0 %287
    %v290 = vmul.f32 %v272, %v288
    %292 = vrot.lane.b32.xlu0 %v290, 64
    %v293 = vpop.permute.xlu0 %292
    %295 = vst.msk [vmem:[#allocation2] sm:$0xff] %vm157, %v293
    %v296 = vpack.c.bf16 %v290, %v290
    %298 = vrot.lane.b32.xlu0 %v296, 64
    %v299 = vpop.permute.xlu0 %298
    %v301 = vsel %vm157, %v299, 0
    %303 = vmatpush.bf16.msra.mxu0 0
    %304 = vmatpush.bf16.msra.mxu0 0
    %305 = vmatpush.bf16.msra.mxu0 0
    %306 = vmatpush.bf16.msra.mxu0 0
    %307 = vmatpush.bf16.msra.mxu0 0
    %308 = vmatpush.bf16.msra.mxu0 0
    %309 = vmatpush.bf16.msra.mxu0 %v234
    %310 = vmatpush.bf16.msra.mxu0 %v233
    %311 = vmatmul.bf16.gmra.mxu0 %v301
    %v312 = vpop.f32.mrf.mxu0
    %v313 = vadd.f32 0.0, %v312
    %v314 = vpop.f32.mrf.mxu0
    %315 = vdwg.mxu0
    %v316 = vadd.f32 %v222, %v313
    %v317 = vxor.u32 %v316, 2147483648
    %v318 = vmul.f32 %v317, 1.442695
    %v319 = vpow.pop %v318
    %v320 = vadd.f32 %v319, 1.0
    %v321 = vrcp.pop %v320
    %v322 = vmul.f32 %v320, %v321
    %v323 = vsub.f32 1.0, %v322
    %v324 = vmul.f32 %v321, %v323
    %v325 = vadd.f32 %v321, %v324
    %vm326 = vweird.f32 %v320
    %vm327 = vweird.f32 %v321
    %vm328 = vmor %vm326, %vm327
    %v329 = vsel %vm328, %v321, %v325
    %v330 = vand.u32 2147483647, %v320
    %vm331 = vcmp.eq.f32.partialorder %v330, 8.507059e+37
    %v332 = vand.u32 %v320, 2147483648
    %v333 = vor.u32 1.1754944e-38, %v332
    %v334 = vsel %vm331, %v333, %v329
    %v335 = vmul.f32 1.0, %v334
    %v336 = vtanh.pop %v316
    %v337 = vmul.f32 %v335, %v284
    %339 = vrot.lane.b32.xlu0 %v336, 32
    %v340 = vpop.permute.xlu0 %339
    %v342 = vmul.f32 %v335, %v340
    %344 = vrot.lane.b32.xlu0 %v342, 32
    %v345 = vpop.permute.xlu0 %344
    %v347 = vadd.f32 %v337, %v345
    %v348 = vtanh.pop %v347
    %350 = vrot.lane.b32.xlu0 %v348, 32
    %v351 = vpop.permute.xlu0 %350
    %v353 = vmul.f32 %v335, %v351
    %355 = vrot.lane.b32.xlu0 %v353, 64
    %v356 = vpop.permute.xlu0 %355
    %358 = vst.msk [vmem:[#allocation2 + $0x8] sm:$0xff] %vm157, %v356
    %v359 = vpack.c.bf16 %v353, %v353
    %361 = vrot.lane.b32.xlu0 %v359, 64
    %v362 = vpop.permute.xlu0 %361
    %v364 = vsel %vm157, %v362, 0
    %366 = vmatpush.bf16.msra.mxu0 0
    %367 = vmatpush.bf16.msra.mxu0 0
    %368 = vmatpush.bf16.msra.mxu0 0
    %369 = vmatpush.bf16.msra.mxu0 0
    %370 = vmatpush.bf16.msra.mxu0 0
    %371 = vmatpush.bf16.msra.mxu0 0
    %372 = vmatpush.bf16.msra.mxu0 %v234
    %373 = vmatpush.bf16.msra.mxu0 %v233
    %374 = vmatmul.bf16.gmra.mxu0 %v364
    %v375 = vpop.f32.mrf.mxu0
    %v376 = vadd.f32 0.0, %v375
    %v377 = vpop.f32.mrf.mxu0
    %378 = vdwg.mxu0
    %v379 = vadd.f32 %v222, %v376
    %v380 = vxor.u32 %v379, 2147483648
    %v381 = vmul.f32 %v380, 1.442695
    %v382 = vpow.pop %v381
    %v383 = vadd.f32 %v382, 1.0
    %v384 = vrcp.pop %v383
    %v385 = vmul.f32 %v383, %v384
    %v386 = vsub.f32 1.0, %v385
    %v387 = vmul.f32 %v384, %v386
    %v388 = vadd.f32 %v384, %v387
    %vm389 = vweird.f32 %v383
    %vm390 = vweird.f32 %v384
    %vm391 = vmor %vm389, %vm390
    %v392 = vsel %vm391, %v384, %v388
    %v393 = vand.u32 2147483647, %v383
    %vm394 = vcmp.eq.f32.partialorder %v393, 8.507059e+37
    %v395 = vand.u32 %v383, 2147483648
    %v396 = vor.u32 1.1754944e-38, %v395
    %v397 = vsel %vm394, %v396, %v392
    %v398 = vmul.f32 1.0, %v397
    %v399 = vtanh.pop %v379
    %v400 = vmul.f32 %v398, %v347
    %402 = vrot.lane.b32.xlu0 %v399, 32
    %v403 = vpop.permute.xlu0 %402
    %v405 = vmul.f32 %v398, %v403
    %407 = vrot.lane.b32.xlu0 %v405, 32
    %v408 = vpop.permute.xlu0 %407
    %v410 = vadd.f32 %v400, %v408
    %v411 = vtanh.pop %v410
    %413 = vrot.lane.b32.xlu0 %v411, 32
    %v414 = vpop.permute.xlu0 %413
    %v416 = vmul.f32 %v398, %v414
    %418 = vrot.lane.b32.xlu0 %v416, 64
    %v419 = vpop.permute.xlu0 %418
    %421 = vst.msk [vmem:[#allocation2 + $0x10] sm:$0xff] %vm157, %v419
    %v422 = vpack.c.bf16 %v416, %v416
    %424 = vrot.lane.b32.xlu0 %v422, 64
    %v425 = vpop.permute.xlu0 %424
    %v427 = vsel %vm157, %v425, 0
    %429 = vmatpush.bf16.msra.mxu0 0
    %430 = vmatpush.bf16.msra.mxu0 0
    %431 = vmatpush.bf16.msra.mxu0 0
    %432 = vmatpush.bf16.msra.mxu0 0
    %433 = vmatpush.bf16.msra.mxu0 0
    %434 = vmatpush.bf16.msra.mxu0 0
    %435 = vmatpush.bf16.msra.mxu0 %v234
    %436 = vmatpush.bf16.msra.mxu0 %v233
    %437 = vmatmul.bf16.gmra.mxu0 %v427
    %v438 = vpop.f32.mrf.mxu0
    %v439 = vadd.f32 0.0, %v438
    %v440 = vpop.f32.mrf.mxu0
    %441 = vdwg.mxu0
    %v442 = vadd.f32 %v222, %v439
    %v443 = vxor.u32 %v442, 2147483648
    %v444 = vmul.f32 %v443, 1.442695
    %v445 = vpow.pop %v444
    %v446 = vadd.f32 %v445, 1.0
    %v447 = vrcp.pop %v446
    %v448 = vmul.f32 %v446, %v447
    %v449 = vsub.f32 1.0, %v448
    %v450 = vmul.f32 %v447, %v449
    %v451 = vadd.f32 %v447, %v450
    %vm452 = vweird.f32 %v446
    %vm453 = vweird.f32 %v447
    %vm454 = vmor %vm452, %vm453
    %v455 = vsel %vm454, %v447, %v451
    %v456 = vand.u32 2147483647, %v446
    %vm457 = vcmp.eq.f32.partialorder %v456, 8.507059e+37
    %v458 = vand.u32 %v446, 2147483648
    %v459 = vor.u32 1.1754944e-38, %v458
    %v460 = vsel %vm457, %v459, %v455
    %v461 = vmul.f32 1.0, %v460
    %v462 = vtanh.pop %v442
    %v463 = vmul.f32 %v461, %v410
    %465 = vrot.lane.b32.xlu0 %v462, 32
    %v466 = vpop.permute.xlu0 %465
    %v468 = vmul.f32 %v461, %v466
    %470 = vrot.lane.b32.xlu0 %v468, 32
    %v471 = vpop.permute.xlu0 %470
    %v473 = vadd.f32 %v463, %v471
    %v474 = vtanh.pop %v473
    %476 = vrot.lane.b32.xlu0 %v474, 32
    %v477 = vpop.permute.xlu0 %476
    %v479 = vmul.f32 %v461, %v477
    %481 = vrot.lane.b32.xlu0 %v479, 64
    %v482 = vpop.permute.xlu0 %481
    %484 = vst.msk [vmem:[#allocation2 + $0x18] sm:$0xff] %vm157, %v482
    %v485 = vpack.c.bf16 %v479, %v479
    %487 = vrot.lane.b32.xlu0 %v485, 64
    %v488 = vpop.permute.xlu0 %487
    %v490 = vsel %vm157, %v488, 0
    %492 = vmatpush.bf16.msra.mxu0 0
    %493 = vmatpush.bf16.msra.mxu0 0
    %494 = vmatpush.bf16.msra.mxu0 0
    %495 = vmatpush.bf16.msra.mxu0 0
    %496 = vmatpush.bf16.msra.mxu0 0
    %497 = vmatpush.bf16.msra.mxu0 0
    %498 = vmatpush.bf16.msra.mxu0 %v234
    %499 = vmatpush.bf16.msra.mxu0 %v233
    %500 = vmatmul.bf16.gmra.mxu0 %v490
    %v501 = vpop.f32.mrf.mxu0
    %v502 = vadd.f32 0.0, %v501
    %v503 = vpop.f32.mrf.mxu0
    %504 = vdwg.mxu0
    %v505 = vadd.f32 %v222, %v502
    %v506 = vxor.u32 %v505, 2147483648
    %v507 = vmul.f32 %v506, 1.442695
    %v508 = vpow.pop %v507
    %v509 = vadd.f32 %v508, 1.0
    %v510 = vrcp.pop %v509
    %v511 = vmul.f32 %v509, %v510
    %v512 = vsub.f32 1.0, %v511
    %v513 = vmul.f32 %v510, %v512
    %v514 = vadd.f32 %v510, %v513
    %vm515 = vweird.f32 %v509
    %vm516 = vweird.f32 %v510
    %vm517 = vmor %vm515, %vm516
    %v518 = vsel %vm517, %v510, %v514
    %v519 = vand.u32 2147483647, %v509
    %vm520 = vcmp.eq.f32.partialorder %v519, 8.507059e+37
    %v521 = vand.u32 %v509, 2147483648
    %v522 = vor.u32 1.1754944e-38, %v521
    %v523 = vsel %vm520, %v522, %v518
    %v524 = vmul.f32 1.0, %v523
    %v525 = vtanh.pop %v505
    %v526 = vmul.f32 %v524, %v473
    %528 = vrot.lane.b32.xlu0 %v525, 32
    %v529 = vpop.permute.xlu0 %528
    %v531 = vmul.f32 %v524, %v529
    %533 = vrot.lane.b32.xlu0 %v531, 32
    %v534 = vpop.permute.xlu0 %533
    %v536 = vadd.f32 %v526, %v534
    %v537 = vtanh.pop %v536
    %539 = vrot.lane.b32.xlu0 %v537, 32
    %v540 = vpop.permute.xlu0 %539
    %v542 = vmul.f32 %v524, %v540
    %544 = vrot.lane.b32.xlu0 %v542, 64
    %v545 = vpop.permute.xlu0 %544
    %547 = vst.msk [vmem:[#allocation2 + $0x20] sm:$0xff] %vm157, %v545
    %v548 = vpack.c.bf16 %v542, %v542
    %550 = vrot.lane.b32.xlu0 %v548, 64
    %v551 = vpop.permute.xlu0 %550
    %v553 = vsel %vm157, %v551, 0
    %555 = vmatpush.bf16.msra.mxu0 0
    %556 = vmatpush.bf16.msra.mxu0 0
    %557 = vmatpush.bf16.msra.mxu0 0
    %558 = vmatpush.bf16.msra.mxu0 0
    %559 = vmatpush.bf16.msra.mxu0 0
    %560 = vmatpush.bf16.msra.mxu0 0
    %561 = vmatpush.bf16.msra.mxu0 %v234
    %562 = vmatpush.bf16.msra.mxu0 %v233
    %563 = vmatmul.bf16.gmra.mxu0 %v553
    %v564 = vpop.f32.mrf.mxu0
    %v565 = vadd.f32 0.0, %v564
    %v566 = vpop.f32.mrf.mxu0
    %567 = vdwg.mxu0
    %v568 = vadd.f32 %v222, %v565
    %v569 = vxor.u32 %v568, 2147483648
    %v570 = vmul.f32 %v569, 1.442695
    %v571 = vpow.pop %v570
    %v572 = vadd.f32 %v571, 1.0
    %v573 = vrcp.pop %v572
    %v574 = vmul.f32 %v572, %v573
    %v575 = vsub.f32 1.0, %v574
    %v576 = vmul.f32 %v573, %v575
    %v577 = vadd.f32 %v573, %v576
    %vm578 = vweird.f32 %v572
    %vm579 = vweird.f32 %v573
    %vm580 = vmor %vm578, %vm579
    %v581 = vsel %vm580, %v573, %v577
    %v582 = vand.u32 2147483647, %v572
    %vm583 = vcmp.eq.f32.partialorder %v582, 8.507059e+37
    %v584 = vand.u32 %v572, 2147483648
    %v585 = vor.u32 1.1754944e-38, %v584
    %v586 = vsel %vm583, %v585, %v581
    %v587 = vmul.f32 1.0, %v586
    %v588 = vtanh.pop %v568
    %v589 = vmul.f32 %v587, %v536
    %591 = vrot.lane.b32.xlu0 %v588, 32
    %v592 = vpop.permute.xlu0 %591
    %v594 = vmul.f32 %v587, %v592
    %596 = vrot.lane.b32.xlu0 %v594, 32
    %v597 = vpop.permute.xlu0 %596
    %v599 = vadd.f32 %v589, %v597
    %v600 = vtanh.pop %v599
    %602 = vrot.lane.b32.xlu0 %v600, 32
    %v603 = vpop.permute.xlu0 %602
    %v605 = vmul.f32 %v587, %v603
    %607 = vrot.lane.b32.xlu0 %v605, 64
    %v608 = vpop.permute.xlu0 %607
    %610 = vst.msk [vmem:[#allocation2 + $0x28] sm:$0xff] %vm157, %v608
    %v611 = vpack.c.bf16 %v605, %v605
    %613 = vrot.lane.b32.xlu0 %v611, 64
    %v614 = vpop.permute.xlu0 %613
    %v616 = vsel %vm157, %v614, 0
    %618 = vmatpush.bf16.msra.mxu0 0
    %619 = vmatpush.bf16.msra.mxu0 0
    %620 = vmatpush.bf16.msra.mxu0 0
    %621 = vmatpush.bf16.msra.mxu0 0
    %622 = vmatpush.bf16.msra.mxu0 0
    %623 = vmatpush.bf16.msra.mxu0 0
    %624 = vmatpush.bf16.msra.mxu0 %v234
    %625 = vmatpush.bf16.msra.mxu0 %v233
    %626 = vmatmul.bf16.gmra.mxu0 %v616
    %v627 = vpop.f32.mrf.mxu0
    %v628 = vadd.f32 0.0, %v627
    %v629 = vpop.f32.mrf.mxu0
    %630 = vdwg.mxu0
    %v631 = vadd.f32 %v222, %v628
    %v632 = vxor.u32 %v631, 2147483648
    %v633 = vmul.f32 %v632, 1.442695
    %v634 = vpow.pop %v633
    %v635 = vadd.f32 %v634, 1.0
    %v636 = vrcp.pop %v635
    %v637 = vmul.f32 %v635, %v636
    %v638 = vsub.f32 1.0, %v637
    %v639 = vmul.f32 %v636, %v638
    %v640 = vadd.f32 %v636, %v639
    %vm641 = vweird.f32 %v635
    %vm642 = vweird.f32 %v636
    %vm643 = vmor %vm641, %vm642
    %v644 = vsel %vm643, %v636, %v640
    %v645 = vand.u32 2147483647, %v635
    %vm646 = vcmp.eq.f32.partialorder %v645, 8.507059e+37
    %v647 = vand.u32 %v635, 2147483648
    %v648 = vor.u32 1.1754944e-38, %v647
    %v649 = vsel %vm646, %v648, %v644
    %v650 = vmul.f32 1.0, %v649
    %v651 = vtanh.pop %v631
    %v652 = vmul.f32 %v650, %v599
    %654 = vrot.lane.b32.xlu0 %v651, 32
    %v655 = vpop.permute.xlu0 %654
    %v657 = vmul.f32 %v650, %v655
    %659 = vrot.lane.b32.xlu0 %v657, 32
    %v660 = vpop.permute.xlu0 %659
    %v662 = vadd.f32 %v652, %v660
    %v663 = vtanh.pop %v662
    %665 = vrot.lane.b32.xlu0 %v663, 32
    %v666 = vpop.permute.xlu0 %665
    %v668 = vmul.f32 %v650, %v666
    %670 = vrot.lane.b32.xlu0 %v668, 64
    %v671 = vpop.permute.xlu0 %670
    %673 = vst.msk [vmem:[#allocation2 + $0x30] sm:$0xff] %vm157, %v671
    %v674 = vpack.c.bf16 %v668, %v668
    %676 = vrot.lane.b32.xlu0 %v674, 64
    %v677 = vpop.permute.xlu0 %676
    %v679 = vsel %vm157, %v677, 0
    %681 = vmatpush.bf16.msra.mxu0 0
    %682 = vmatpush.bf16.msra.mxu0 0
    %683 = vmatpush.bf16.msra.mxu0 0
    %684 = vmatpush.bf16.msra.mxu0 0
    %685 = vmatpush.bf16.msra.mxu0 0
    %686 = vmatpush.bf16.msra.mxu0 0
    %687 = vmatpush.bf16.msra.mxu0 %v234
    %688 = vmatpush.bf16.msra.mxu0 %v233
    %689 = vmatmul.bf16.gmra.mxu0 %v679
    %v690 = vpop.f32.mrf.mxu0
    %v691 = vadd.f32 0.0, %v690
    %v692 = vpop.f32.mrf.mxu0
    %693 = vdwg.mxu0
    %v694 = vadd.f32 %v222, %v691
    %v695 = vxor.u32 %v694, 2147483648
    %v696 = vmul.f32 %v695, 1.442695
    %v697 = vpow.pop %v696
    %v698 = vadd.f32 %v697, 1.0
    %v699 = vrcp.pop %v698
    %v700 = vmul.f32 %v698, %v699
    %v701 = vsub.f32 1.0, %v700
    %v702 = vmul.f32 %v699, %v701
    %v703 = vadd.f32 %v699, %v702
    %vm704 = vweird.f32 %v698
    %vm705 = vweird.f32 %v699
    %vm706 = vmor %vm704, %vm705
    %v707 = vsel %vm706, %v699, %v703
    %v708 = vand.u32 2147483647, %v698
    %vm709 = vcmp.eq.f32.partialorder %v708, 8.507059e+37
    %v710 = vand.u32 %v698, 2147483648
    %v711 = vor.u32 1.1754944e-38, %v710
    %v712 = vsel %vm709, %v711, %v707
    %v713 = vmul.f32 1.0, %v712
    %v714 = vtanh.pop %v694
    %v715 = vmul.f32 %v713, %v662
    %717 = vrot.lane.b32.xlu0 %v714, 32
    %v718 = vpop.permute.xlu0 %717
    %v720 = vmul.f32 %v713, %v718
    %722 = vrot.lane.b32.xlu0 %v720, 32
    %v723 = vpop.permute.xlu0 %722
    %v725 = vadd.f32 %v715, %v723
    %v726 = vtanh.pop %v725
    %728 = vrot.lane.b32.xlu0 %v726, 32
    %v729 = vpop.permute.xlu0 %728
    %v731 = vmul.f32 %v713, %v729
    %733 = vrot.lane.b32.xlu0 %v731, 64
    %v734 = vpop.permute.xlu0 %733
    %736 = vst.msk [vmem:[#allocation2 + $0x38] sm:$0xff] %vm157, %v734
    %v737 = vld [vmem:[#allocation2] sm:$0xff]
    %v738 = vld [vmem:[#allocation2 + $0x8] sm:$0xff]
    %v739 = vld [vmem:[#allocation2 + $0x10] sm:$0xff]
    %v740 = vld [vmem:[#allocation2 + $0x18] sm:$0xff]
    %v741 = vld [vmem:[#allocation2 + $0x20] sm:$0xff]
    %v742 = vld [vmem:[#allocation2 + $0x28] sm:$0xff]
    %v743 = vld [vmem:[#allocation2 + $0x30] sm:$0xff]
    %v744 = vld [vmem:[#allocation2 + $0x38] sm:$0xff]
    %v745 = vpack.c.bf16 %v738, %v737
    %v746 = vpack.c.bf16 %v740, %v739
    %v747 = vpack.c.bf16 %v742, %v741
    %v748 = vpack.c.bf16 %v744, %v743
    %v750 = vperm.slane %v139, 0
    %v756 = vunpack.c.l.b16 %v131
    %v757 = vunpack.c.l.b16 %v132
    %v758 = vunpack.c.l.b16 %v133
    %v759 = vunpack.c.l.b16 %v134
    %v760 = vpack.c.b16 %v757, %v756
    %v761 = vpack.c.b16 %v759, %v758
    %v765 = vsel %vm157, %v745, 0
    %v768 = vsel %vm157, %v746, 0
    %v771 = vsel %vm157, %v747, 0
    %v774 = vsel %vm157, %v748, 0
    %776 = vmatpush.bf16.msra.mxu0 0
    %777 = vmatpush.bf16.msra.mxu0 0
    %778 = vmatpush.bf16.msra.mxu0 0
    %779 = vmatpush.bf16.msra.mxu0 0
    %780 = vmatpush.bf16.msra.mxu0 0
    %781 = vmatpush.bf16.msra.mxu0 0
    %782 = vmatpush.bf16.msra.mxu0 %v761
    %783 = vmatpush.bf16.msra.mxu0 %v760
    %784 = vmatmul.bf16.gmra.mxu0 %v765
    %v785 = vpop.f32.mrf.mxu0
    %v786 = vadd.f32 %v750, %v785
    %v787 = vpop.f32.mrf.mxu0
    %v788 = vadd.f32 %v750, %v787
    %789 = vmatmul.bf16.gmra.mxu0 %v768
    %v790 = vpop.f32.mrf.mxu0
    %v791 = vadd.f32 %v750, %v790
    %v792 = vpop.f32.mrf.mxu0
    %v793 = vadd.f32 %v750, %v792
    %794 = vmatmul.bf16.gmra.mxu0 %v771
    %v795 = vpop.f32.mrf.mxu0
    %v796 = vadd.f32 %v750, %v795
    %v797 = vpop.f32.mrf.mxu0
    %v798 = vadd.f32 %v750, %v797
    %799 = vmatmul.bf16.gmra.mxu0 %v774
    %v800 = vpop.f32.mrf.mxu0
    %v801 = vadd.f32 %v750, %v800
    %v802 = vpop.f32.mrf.mxu0
    %v803 = vadd.f32 %v750, %v802
    %804 = vdwg.mxu0
    %805 = vst [vmem:[#allocation3] sm:$0xff] %v786
    %806 = vst [vmem:[#allocation3 + $0x8] sm:$0xff] %v788
    %807 = vst [vmem:[#allocation3 + $0x10] sm:$0xff] %v791
    %808 = vst [vmem:[#allocation3 + $0x18] sm:$0xff] %v793
    %809 = vst [vmem:[#allocation3 + $0x20] sm:$0xff] %v796
    %810 = vst [vmem:[#allocation3 + $0x28] sm:$0xff] %v798
    %811 = vst [vmem:[#allocation3 + $0x30] sm:$0xff] %v801
    %812 = vst [vmem:[#allocation3 + $0x38] sm:$0xff] %v803
    %v813 = vld [vmem:[#allocation3] sm:$0xff]
    %v818 = vunpack.c.l.b16 %v135
    %v819 = vunpack.c.l.b16 %v136
    %v820 = vunpack.c.l.b16 %v137
    %v821 = vunpack.c.l.b16 %v138
    %v822 = vpack.c.b16 %v819, %v818
    %v823 = vpack.c.b16 %v821, %v820
    %826 = vmatpush.bf16.msra.mxu0 0
    %827 = vmatpush.bf16.msra.mxu0 0
    %828 = vmatpush.bf16.msra.mxu0 0
    %829 = vmatpush.bf16.msra.mxu0 0
    %830 = vmatpush.bf16.msra.mxu0 0
    %831 = vmatpush.bf16.msra.mxu0 0
    %832 = vmatpush.bf16.msra.mxu0 %v823
    %833 = vmatpush.bf16.msra.mxu0 %v822
    %834 = vmatmul.bf16.gmra.mxu0 %v238
    %v835 = vpop.f32.mrf.mxu0
    %v836 = vadd.f32 0.0, %v835
    %v837 = vpop.f32.mrf.mxu0
    %838 = vdwg.mxu0
    %v839 = vadd.f32 %v813, %v836
    %v840 = vxor.u32 %v839, 2147483648
    %v841 = vmul.f32 %v840, 1.442695
    %v842 = vpow.pop %v841
    %v843 = vadd.f32 %v842, 1.0
    %v844 = vrcp.pop %v843
    %v845 = vmul.f32 %v843, %v844
    %v846 = vsub.f32 1.0, %v845
    %v847 = vmul.f32 %v844, %v846
    %v848 = vadd.f32 %v844, %v847
    %vm849 = vweird.f32 %v843
    %vm850 = vweird.f32 %v844
    %vm851 = vmor %vm849, %vm850
    %v852 = vsel %vm851, %v844, %v848
    %v853 = vand.u32 2147483647, %v843
    %vm854 = vcmp.eq.f32.partialorder %v853, 8.507059e+37
    %v855 = vand.u32 %v843, 2147483648
    %v856 = vor.u32 1.1754944e-38, %v855
    %v857 = vsel %vm854, %v856, %v852
    %v858 = vmul.f32 1.0, %v857
    %v859 = vtanh.pop %v839
    %v860 = vmul.f32 %v858, 0.0
    %862 = vrot.lane.b32.xlu0 %v859, 32
    %v863 = vpop.permute.xlu0 %862
    %v865 = vmul.f32 %v858, %v863
    %867 = vrot.lane.b32.xlu0 %v865, 32
    %v868 = vpop.permute.xlu0 %867
    %v870 = vadd.f32 %v860, %v868
    %v871 = vtanh.pop %v870
    %873 = vrot.lane.b32.xlu0 %v871, 32
    %v874 = vpop.permute.xlu0 %873
    %v876 = vmul.f32 %v858, %v874
    %878 = vrot.lane.b32.xlu0 %v876, 64
    %v879 = vpop.permute.xlu0 %878
    %881 = vst.msk [vmem:[#allocation2] sm:$0xff] %vm157, %v879
    %v882 = vld [vmem:[#allocation3 + $0x8] sm:$0xff]
    %v883 = vpack.c.bf16 %v876, %v876
    %885 = vrot.lane.b32.xlu0 %v883, 64
    %v886 = vpop.permute.xlu0 %885
    %v888 = vsel %vm157, %v886, 0
    %890 = vmatpush.bf16.msra.mxu0 0
    %891 = vmatpush.bf16.msra.mxu0 0
    %892 = vmatpush.bf16.msra.mxu0 0
    %893 = vmatpush.bf16.msra.mxu0 0
    %894 = vmatpush.bf16.msra.mxu0 0
    %895 = vmatpush.bf16.msra.mxu0 0
    %896 = vmatpush.bf16.msra.mxu0 %v823
    %897 = vmatpush.bf16.msra.mxu0 %v822
    %898 = vmatmul.bf16.gmra.mxu0 %v888
    %v899 = vpop.f32.mrf.mxu0
    %v900 = vadd.f32 0.0, %v899
    %v901 = vpop.f32.mrf.mxu0
    %902 = vdwg.mxu0
    %v903 = vadd.f32 %v882, %v900
    %v904 = vxor.u32 %v903, 2147483648
    %v905 = vmul.f32 %v904, 1.442695
    %v906 = vpow.pop %v905
    %v907 = vadd.f32 %v906, 1.0
    %v908 = vrcp.pop %v907
    %v909 = vmul.f32 %v907, %v908
    %v910 = vsub.f32 1.0, %v909
    %v911 = vmul.f32 %v908, %v910
    %v912 = vadd.f32 %v908, %v911
    %vm913 = vweird.f32 %v907
    %vm914 = vweird.f32 %v908
    %vm915 = vmor %vm913, %vm914
    %v916 = vsel %vm915, %v908, %v912
    %v917 = vand.u32 2147483647, %v907
    %vm918 = vcmp.eq.f32.partialorder %v917, 8.507059e+37
    %v919 = vand.u32 %v907, 2147483648
    %v920 = vor.u32 1.1754944e-38, %v919
    %v921 = vsel %vm918, %v920, %v916
    %v922 = vmul.f32 1.0, %v921
    %v923 = vtanh.pop %v903
    %v924 = vmul.f32 %v922, %v870
    %926 = vrot.lane.b32.xlu0 %v923, 32
    %v927 = vpop.permute.xlu0 %926
    %v929 = vmul.f32 %v922, %v927
    %931 = vrot.lane.b32.xlu0 %v929, 32
    %v932 = vpop.permute.xlu0 %931
    %v934 = vadd.f32 %v924, %v932
    %v935 = vtanh.pop %v934
    %937 = vrot.lane.b32.xlu0 %v935, 32
    %v938 = vpop.permute.xlu0 %937
    %v940 = vmul.f32 %v922, %v938
    %942 = vrot.lane.b32.xlu0 %v940, 64
    %v943 = vpop.permute.xlu0 %942
    %945 = vst.msk [vmem:[#allocation2 + $0x8] sm:$0xff] %vm157, %v943
    %v946 = vld [vmem:[#allocation3 + $0x10] sm:$0xff]
    %v947 = vpack.c.bf16 %v940, %v940
    %949 = vrot.lane.b32.xlu0 %v947, 64
    %v950 = vpop.permute.xlu0 %949
    %v952 = vsel %vm157, %v950, 0
    %954 = vmatpush.bf16.msra.mxu0 0
    %955 = vmatpush.bf16.msra.mxu0 0
    %956 = vmatpush.bf16.msra.mxu0 0
    %957 = vmatpush.bf16.msra.mxu0 0
    %958 = vmatpush.bf16.msra.mxu0 0
    %959 = vmatpush.bf16.msra.mxu0 0
    %960 = vmatpush.bf16.msra.mxu0 %v823
    %961 = vmatpush.bf16.msra.mxu0 %v822
    %962 = vmatmul.bf16.gmra.mxu0 %v952
    %v963 = vpop.f32.mrf.mxu0
    %v964 = vadd.f32 0.0, %v963
    %v965 = vpop.f32.mrf.mxu0
    %966 = vdwg.mxu0
    %v967 = vadd.f32 %v946, %v964
    %v968 = vxor.u32 %v967, 2147483648
    %v969 = vmul.f32 %v968, 1.442695
    %v970 = vpow.pop %v969
    %v971 = vadd.f32 %v970, 1.0
    %v972 = vrcp.pop %v971
    %v973 = vmul.f32 %v971, %v972
    %v974 = vsub.f32 1.0, %v973
    %v975 = vmul.f32 %v972, %v974
    %v976 = vadd.f32 %v972, %v975
    %vm977 = vweird.f32 %v971
    %vm978 = vweird.f32 %v972
    %vm979 = vmor %vm977, %vm978
    %v980 = vsel %vm979, %v972, %v976
    %v981 = vand.u32 2147483647, %v971
    %vm982 = vcmp.eq.f32.partialorder %v981, 8.507059e+37
    %v983 = vand.u32 %v971, 2147483648
    %v984 = vor.u32 1.1754944e-38, %v983
    %v985 = vsel %vm982, %v984, %v980
    %v986 = vmul.f32 1.0, %v985
    %v987 = vtanh.pop %v967
    %v988 = vmul.f32 %v986, %v934
    %990 = vrot.lane.b32.xlu0 %v987, 32
    %v991 = vpop.permute.xlu0 %990
    %v993 = vmul.f32 %v986, %v991
    %995 = vrot.lane.b32.xlu0 %v993, 32
    %v996 = vpop.permute.xlu0 %995
    %v998 = vadd.f32 %v988, %v996
    %v999 = vtanh.pop %v998
    %1001 = vrot.lane.b32.xlu0 %v999, 32
    %v1002 = vpop.permute.xlu0 %1001
    %v1004 = vmul.f32 %v986, %v1002
    %1006 = vrot.lane.b32.xlu0 %v1004, 64
    %v1007 = vpop.permute.xlu0 %1006
    %1009 = vst.msk [vmem:[#allocation2 + $0x10] sm:$0xff] %vm157, %v1007
    %v1010 = vld [vmem:[#allocation3 + $0x18] sm:$0xff]
    %v1011 = vpack.c.bf16 %v1004, %v1004
    %1013 = vrot.lane.b32.xlu0 %v1011, 64
    %v1014 = vpop.permute.xlu0 %1013
    %v1016 = vsel %vm157, %v1014, 0
    %1018 = vmatpush.bf16.msra.mxu0 0
    %1019 = vmatpush.bf16.msra.mxu0 0
    %1020 = vmatpush.bf16.msra.mxu0 0
    %1021 = vmatpush.bf16.msra.mxu0 0
    %1022 = vmatpush.bf16.msra.mxu0 0
    %1023 = vmatpush.bf16.msra.mxu0 0
    %1024 = vmatpush.bf16.msra.mxu0 %v823
    %1025 = vmatpush.bf16.msra.mxu0 %v822
    %1026 = vmatmul.bf16.gmra.mxu0 %v1016
    %v1027 = vpop.f32.mrf.mxu0
    %v1028 = vadd.f32 0.0, %v1027
    %v1029 = vpop.f32.mrf.mxu0
    %1030 = vdwg.mxu0
    %v1031 = vadd.f32 %v1010, %v1028
    %v1032 = vxor.u32 %v1031, 2147483648
    %v1033 = vmul.f32 %v1032, 1.442695
    %v1034 = vpow.pop %v1033
    %v1035 = vadd.f32 %v1034, 1.0
    %v1036 = vrcp.pop %v1035
    %v1037 = vmul.f32 %v1035, %v1036
    %v1038 = vsub.f32 1.0, %v1037
    %v1039 = vmul.f32 %v1036, %v1038
    %v1040 = vadd.f32 %v1036, %v1039
    %vm1041 = vweird.f32 %v1035
    %vm1042 = vweird.f32 %v1036
    %vm1043 = vmor %vm1041, %vm1042
    %v1044 = vsel %vm1043, %v1036, %v1040
    %v1045 = vand.u32 2147483647, %v1035
    %vm1046 = vcmp.eq.f32.partialorder %v1045, 8.507059e+37
    %v1047 = vand.u32 %v1035, 2147483648
    %v1048 = vor.u32 1.1754944e-38, %v1047
    %v1049 = vsel %vm1046, %v1048, %v1044
    %v1050 = vmul.f32 1.0, %v1049
    %v1051 = vtanh.pop %v1031
    %v1052 = vmul.f32 %v1050, %v998
    %1054 = vrot.lane.b32.xlu0 %v1051, 32
    %v1055 = vpop.permute.xlu0 %1054
    %v1057 = vmul.f32 %v1050, %v1055
    %1059 = vrot.lane.b32.xlu0 %v1057, 32
    %v1060 = vpop.permute.xlu0 %1059
    %v1062 = vadd.f32 %v1052, %v1060
    %v1063 = vtanh.pop %v1062
    %1065 = vrot.lane.b32.xlu0 %v1063, 32
    %v1066 = vpop.permute.xlu0 %1065
    %v1068 = vmul.f32 %v1050, %v1066
    %1070 = vrot.lane.b32.xlu0 %v1068, 64
    %v1071 = vpop.permute.xlu0 %1070
    %1073 = vst.msk [vmem:[#allocation2 + $0x18] sm:$0xff] %vm157, %v1071
    %v1074 = vld [vmem:[#allocation3 + $0x20] sm:$0xff]
    %v1075 = vpack.c.bf16 %v1068, %v1068
    %1077 = vrot.lane.b32.xlu0 %v1075, 64
    %v1078 = vpop.permute.xlu0 %1077
    %v1080 = vsel %vm157, %v1078, 0
    %1082 = vmatpush.bf16.msra.mxu0 0
    %1083 = vmatpush.bf16.msra.mxu0 0
    %1084 = vmatpush.bf16.msra.mxu0 0
    %1085 = vmatpush.bf16.msra.mxu0 0
    %1086 = vmatpush.bf16.msra.mxu0 0
    %1087 = vmatpush.bf16.msra.mxu0 0
    %1088 = vmatpush.bf16.msra.mxu0 %v823
    %1089 = vmatpush.bf16.msra.mxu0 %v822
    %1090 = vmatmul.bf16.gmra.mxu0 %v1080
    %v1091 = vpop.f32.mrf.mxu0
    %v1092 = vadd.f32 0.0, %v1091
    %v1093 = vpop.f32.mrf.mxu0
    %1094 = vdwg.mxu0
    %v1095 = vadd.f32 %v1074, %v1092
    %v1096 = vxor.u32 %v1095, 2147483648
    %v1097 = vmul.f32 %v1096, 1.442695
    %v1098 = vpow.pop %v1097
    %v1099 = vadd.f32 %v1098, 1.0
    %v1100 = vrcp.pop %v1099
    %v1101 = vmul.f32 %v1099, %v1100
    %v1102 = vsub.f32 1.0, %v1101
    %v1103 = vmul.f32 %v1100, %v1102
    %v1104 = vadd.f32 %v1100, %v1103
    %vm1105 = vweird.f32 %v1099
    %vm1106 = vweird.f32 %v1100
    %vm1107 = vmor %vm1105, %vm1106
    %v1108 = vsel %vm1107, %v1100, %v1104
    %v1109 = vand.u32 2147483647, %v1099
    %vm1110 = vcmp.eq.f32.partialorder %v1109, 8.507059e+37
    %v1111 = vand.u32 %v1099, 2147483648
    %v1112 = vor.u32 1.1754944e-38, %v1111
    %v1113 = vsel %vm1110, %v1112, %v1108
    %v1114 = vmul.f32 1.0, %v1113
    %v1115 = vtanh.pop %v1095
    %v1116 = vmul.f32 %v1114, %v1062
    %1118 = vrot.lane.b32.xlu0 %v1115, 32
    %v1119 = vpop.permute.xlu0 %1118
    %v1121 = vmul.f32 %v1114, %v1119
    %1123 = vrot.lane.b32.xlu0 %v1121, 32
    %v1124 = vpop.permute.xlu0 %1123
    %v1126 = vadd.f32 %v1116, %v1124
    %v1127 = vtanh.pop %v1126
    %1129 = vrot.lane.b32.xlu0 %v1127, 32
    %v1130 = vpop.permute.xlu0 %1129
    %v1132 = vmul.f32 %v1114, %v1130
    %1134 = vrot.lane.b32.xlu0 %v1132, 64
    %v1135 = vpop.permute.xlu0 %1134
    %1137 = vst.msk [vmem:[#allocation2 + $0x20] sm:$0xff] %vm157, %v1135
    %v1138 = vld [vmem:[#allocation3 + $0x28] sm:$0xff]
    %v1139 = vpack.c.bf16 %v1132, %v1132
    %1141 = vrot.lane.b32.xlu0 %v1139, 64
    %v1142 = vpop.permute.xlu0 %1141
    %v1144 = vsel %vm157, %v1142, 0
    %1146 = vmatpush.bf16.msra.mxu0 0
    %1147 = vmatpush.bf16.msra.mxu0 0
    %1148 = vmatpush.bf16.msra.mxu0 0
    %1149 = vmatpush.bf16.msra.mxu0 0
    %1150 = vmatpush.bf16.msra.mxu0 0
    %1151 = vmatpush.bf16.msra.mxu0 0
    %1152 = vmatpush.bf16.msra.mxu0 %v823
    %1153 = vmatpush.bf16.msra.mxu0 %v822
    %1154 = vmatmul.bf16.gmra.mxu0 %v1144
    %v1155 = vpop.f32.mrf.mxu0
    %v1156 = vadd.f32 0.0, %v1155
    %v1157 = vpop.f32.mrf.mxu0
    %1158 = vdwg.mxu0
    %v1159 = vadd.f32 %v1138, %v1156
    %v1160 = vxor.u32 %v1159, 2147483648
    %v1161 = vmul.f32 %v1160, 1.442695
    %v1162 = vpow.pop %v1161
    %v1163 = vadd.f32 %v1162, 1.0
    %v1164 = vrcp.pop %v1163
    %v1165 = vmul.f32 %v1163, %v1164
    %v1166 = vsub.f32 1.0, %v1165
    %v1167 = vmul.f32 %v1164, %v1166
    %v1168 = vadd.f32 %v1164, %v1167
    %vm1169 = vweird.f32 %v1163
    %vm1170 = vweird.f32 %v1164
    %vm1171 = vmor %vm1169, %vm1170
    %v1172 = vsel %vm1171, %v1164, %v1168
    %v1173 = vand.u32 2147483647, %v1163
    %vm1174 = vcmp.eq.f32.partialorder %v1173, 8.507059e+37
    %v1175 = vand.u32 %v1163, 2147483648
    %v1176 = vor.u32 1.1754944e-38, %v1175
    %v1177 = vsel %vm1174, %v1176, %v1172
    %v1178 = vmul.f32 1.0, %v1177
    %v1179 = vtanh.pop %v1159
    %v1180 = vmul.f32 %v1178, %v1126
    %1182 = vrot.lane.b32.xlu0 %v1179, 32
    %v1183 = vpop.permute.xlu0 %1182
    %v1185 = vmul.f32 %v1178, %v1183
    %1187 = vrot.lane.b32.xlu0 %v1185, 32
    %v1188 = vpop.permute.xlu0 %1187
    %v1190 = vadd.f32 %v1180, %v1188
    %v1191 = vtanh.pop %v1190
    %1193 = vrot.lane.b32.xlu0 %v1191, 32
    %v1194 = vpop.permute.xlu0 %1193
    %v1196 = vmul.f32 %v1178, %v1194
    %1198 = vrot.lane.b32.xlu0 %v1196, 64
    %v1199 = vpop.permute.xlu0 %1198
    %1201 = vst.msk [vmem:[#allocation2 + $0x28] sm:$0xff] %vm157, %v1199
    %v1202 = vld [vmem:[#allocation3 + $0x30] sm:$0xff]
    %v1203 = vpack.c.bf16 %v1196, %v1196
    %1205 = vrot.lane.b32.xlu0 %v1203, 64
    %v1206 = vpop.permute.xlu0 %1205
    %v1208 = vsel %vm157, %v1206, 0
    %1210 = vmatpush.bf16.msra.mxu0 0
    %1211 = vmatpush.bf16.msra.mxu0 0
    %1212 = vmatpush.bf16.msra.mxu0 0
    %1213 = vmatpush.bf16.msra.mxu0 0
    %1214 = vmatpush.bf16.msra.mxu0 0
    %1215 = vmatpush.bf16.msra.mxu0 0
    %1216 = vmatpush.bf16.msra.mxu0 %v823
    %1217 = vmatpush.bf16.msra.mxu0 %v822
    %1218 = vmatmul.bf16.gmra.mxu0 %v1208
    %v1219 = vpop.f32.mrf.mxu0
    %v1220 = vadd.f32 0.0, %v1219
    %v1221 = vpop.f32.mrf.mxu0
    %1222 = vdwg.mxu0
    %v1223 = vadd.f32 %v1202, %v1220
    %v1224 = vxor.u32 %v1223, 2147483648
    %v1225 = vmul.f32 %v1224, 1.442695
    %v1226 = vpow.pop %v1225
    %v1227 = vadd.f32 %v1226, 1.0
    %v1228 = vrcp.pop %v1227
    %v1229 = vmul.f32 %v1227, %v1228
    %v1230 = vsub.f32 1.0, %v1229
    %v1231 = vmul.f32 %v1228, %v1230
    %v1232 = vadd.f32 %v1228, %v1231
    %vm1233 = vweird.f32 %v1227
    %vm1234 = vweird.f32 %v1228
    %vm1235 = vmor %vm1233, %vm1234
    %v1236 = vsel %vm1235, %v1228, %v1232
    %v1237 = vand.u32 2147483647, %v1227
    %vm1238 = vcmp.eq.f32.partialorder %v1237, 8.507059e+37
    %v1239 = vand.u32 %v1227, 2147483648
    %v1240 = vor.u32 1.1754944e-38, %v1239
    %v1241 = vsel %vm1238, %v1240, %v1236
    %v1242 = vmul.f32 1.0, %v1241
    %v1243 = vtanh.pop %v1223
    %v1244 = vmul.f32 %v1242, %v1190
    %1246 = vrot.lane.b32.xlu0 %v1243, 32
    %v1247 = vpop.permute.xlu0 %1246
    %v1249 = vmul.f32 %v1242, %v1247
    %1251 = vrot.lane.b32.xlu0 %v1249, 32
    %v1252 = vpop.permute.xlu0 %1251
    %v1254 = vadd.f32 %v1244, %v1252
    %v1255 = vtanh.pop %v1254
    %1257 = vrot.lane.b32.xlu0 %v1255, 32
    %v1258 = vpop.permute.xlu0 %1257
    %v1260 = vmul.f32 %v1242, %v1258
    %1262 = vrot.lane.b32.xlu0 %v1260, 64
    %v1263 = vpop.permute.xlu0 %1262
    %1265 = vst.msk [vmem:[#allocation2 + $0x30] sm:$0xff] %vm157, %v1263
    %v1266 = vld [vmem:[#allocation3 + $0x38] sm:$0xff]
    %v1267 = vpack.c.bf16 %v1260, %v1260
    %1269 = vrot.lane.b32.xlu0 %v1267, 64
    %v1270 = vpop.permute.xlu0 %1269
    %v1272 = vsel %vm157, %v1270, 0
    %1274 = vmatpush.bf16.msra.mxu0 0
    %1275 = vmatpush.bf16.msra.mxu0 0
    %1276 = vmatpush.bf16.msra.mxu0 0
    %1277 = vmatpush.bf16.msra.mxu0 0
    %1278 = vmatpush.bf16.msra.mxu0 0
    %1279 = vmatpush.bf16.msra.mxu0 0
    %1280 = vmatpush.bf16.msra.mxu0 %v823
    %1281 = vmatpush.bf16.msra.mxu0 %v822
    %1282 = vmatmul.bf16.gmra.mxu0 %v1272
    %v1283 = vpop.f32.mrf.mxu0
    %v1284 = vadd.f32 0.0, %v1283
    %v1285 = vpop.f32.mrf.mxu0
    %1286 = vdwg.mxu0
    %v1287 = vadd.f32 %v1266, %v1284
    %v1288 = vxor.u32 %v1287, 2147483648
    %v1289 = vmul.f32 %v1288, 1.442695
    %v1290 = vpow.pop %v1289
    %v1291 = vadd.f32 %v1290, 1.0
    %v1292 = vrcp.pop %v1291
    %v1293 = vmul.f32 %v1291, %v1292
    %v1294 = vsub.f32 1.0, %v1293
    %v1295 = vmul.f32 %v1292, %v1294
    %v1296 = vadd.f32 %v1292, %v1295
    %vm1297 = vweird.f32 %v1291
    %vm1298 = vweird.f32 %v1292
    %vm1299 = vmor %vm1297, %vm1298
    %v1300 = vsel %vm1299, %v1292, %v1296
    %v1301 = vand.u32 2147483647, %v1291
    %vm1302 = vcmp.eq.f32.partialorder %v1301, 8.507059e+37
    %v1303 = vand.u32 %v1291, 2147483648
    %v1304 = vor.u32 1.1754944e-38, %v1303
    %v1305 = vsel %vm1302, %v1304, %v1300
    %v1306 = vmul.f32 1.0, %v1305
    %v1307 = vtanh.pop %v1287
    %v1308 = vmul.f32 %v1306, %v1254
    %1310 = vrot.lane.b32.xlu0 %v1307, 32
    %v1311 = vpop.permute.xlu0 %1310
    %v1313 = vmul.f32 %v1306, %v1311
    %1315 = vrot.lane.b32.xlu0 %v1313, 32
    %v1316 = vpop.permute.xlu0 %1315
    %v1318 = vadd.f32 %v1308, %v1316
    %v1319 = vtanh.pop %v1318
    %1321 = vrot.lane.b32.xlu0 %v1319, 32
    %v1322 = vpop.permute.xlu0 %1321
    %v1324 = vmul.f32 %v1306, %v1322
    %1326 = vrot.lane.b32.xlu0 %v1324, 64
    %v1327 = vpop.permute.xlu0 %1326
    %1329 = vst.msk [vmem:[#allocation2 + $0x38] sm:$0xff] %vm157, %v1327
    %v1330 = vld [vmem:[#allocation2] sm:$0xff]
    %v1331 = vld [vmem:[#allocation2 + $0x8] sm:$0xff]
    %v1332 = vld [vmem:[#allocation2 + $0x10] sm:$0xff]
    %v1333 = vld [vmem:[#allocation2 + $0x18] sm:$0xff]
    %v1334 = vld [vmem:[#allocation2 + $0x20] sm:$0xff]
    %v1335 = vld [vmem:[#allocation2 + $0x28] sm:$0xff]
    %v1336 = vld [vmem:[#allocation2 + $0x30] sm:$0xff]
    %v1337 = vld [vmem:[#allocation2 + $0x38] sm:$0xff]
    %v1338 = vpack.c.bf16 %v1331, %v1330
    %v1339 = vpack.c.bf16 %v1333, %v1332
    %v1340 = vpack.c.bf16 %v1335, %v1334
    %v1341 = vpack.c.bf16 %v1337, %v1336
    %v1343 = vsel %vm157, %v1338, 0
    %v1346 = vsel %vm157, %v1339, 0
    %v1349 = vsel %vm157, %v1340, 0
    %v1352 = vsel %vm157, %v1341, 0
    %1354 = vmatpush.bf16.msra.mxu0 0
    %1355 = vmatpush.bf16.msra.mxu0 0
    %1356 = vmatpush.bf16.msra.mxu0 0
    %1357 = vmatpush.bf16.msra.mxu0 0
    %1358 = vmatpush.bf16.msra.mxu0 0
    %1359 = vmatpush.bf16.msra.mxu0 0
    %1360 = vmatpush.bf16.msra.mxu0 %v761
    %1361 = vmatpush.bf16.msra.mxu0 %v760
    %1362 = vmatmul.bf16.gmra.mxu0 %v1343
    %v1363 = vpop.f32.mrf.mxu0
    %v1364 = vadd.f32 %v750, %v1363
    %v1365 = vpop.f32.mrf.mxu0
    %v1366 = vadd.f32 %v750, %v1365
    %1367 = vmatmul.bf16.gmra.mxu0 %v1346
    %v1368 = vpop.f32.mrf.mxu0
    %v1369 = vadd.f32 %v750, %v1368
    %v1370 = vpop.f32.mrf.mxu0
    %v1371 = vadd.f32 %v750, %v1370
    %1372 = vmatmul.bf16.gmra.mxu0 %v1349
    %v1373 = vpop.f32.mrf.mxu0
    %v1374 = vadd.f32 %v750, %v1373
    %v1375 = vpop.f32.mrf.mxu0
    %v1376 = vadd.f32 %v750, %v1375
    %1377 = vmatmul.bf16.gmra.mxu0 %v1352
    %v1378 = vpop.f32.mrf.mxu0
    %v1379 = vadd.f32 %v750, %v1378
    %v1380 = vpop.f32.mrf.mxu0
    %v1381 = vadd.f32 %v750, %v1380
    %1382 = vdwg.mxu0
    %1383 = vst [vmem:[#allocation3] sm:$0xff] %v1364
    %1384 = vst [vmem:[#allocation3 + $0x8] sm:$0xff] %v1366
    %1385 = vst [vmem:[#allocation3 + $0x10] sm:$0xff] %v1369
    %1386 = vst [vmem:[#allocation3 + $0x18] sm:$0xff] %v1371
    %1387 = vst [vmem:[#allocation3 + $0x20] sm:$0xff] %v1374
    %1388 = vst [vmem:[#allocation3 + $0x28] sm:$0xff] %v1376
    %1389 = vst [vmem:[#allocation3 + $0x30] sm:$0xff] %v1379
    %1390 = vst [vmem:[#allocation3 + $0x38] sm:$0xff] %v1381
    %v1391 = vld [vmem:[#allocation3] sm:$0xff]
    %v1392 = vadd.f32 %v1391, %v836
    %v1393 = vxor.u32 %v1392, 2147483648
    %v1394 = vmul.f32 %v1393, 1.442695
    %v1395 = vpow.pop %v1394
    %v1396 = vadd.f32 %v1395, 1.0
    %v1397 = vrcp.pop %v1396
    %v1398 = vmul.f32 %v1396, %v1397
    %v1399 = vsub.f32 1.0, %v1398
    %v1400 = vmul.f32 %v1397, %v1399
    %v1401 = vadd.f32 %v1397, %v1400
    %vm1402 = vweird.f32 %v1396
    %vm1403 = vweird.f32 %v1397
    %vm1404 = vmor %vm1402, %vm1403
    %v1405 = vsel %vm1404, %v1397, %v1401
    %v1406 = vand.u32 2147483647, %v1396
    %vm1407 = vcmp.eq.f32.partialorder %v1406, 8.507059e+37
    %v1408 = vand.u32 %v1396, 2147483648
    %v1409 = vor.u32 1.1754944e-38, %v1408
    %v1410 = vsel %vm1407, %v1409, %v1405
    %v1411 = vmul.f32 1.0, %v1410
    %v1412 = vtanh.pop %v1392
    %v1413 = vmul.f32 %v1411, 0.0
    %1415 = vrot.lane.b32.xlu0 %v1412, 32
    %v1416 = vpop.permute.xlu0 %1415
    %v1418 = vmul.f32 %v1411, %v1416
    %1420 = vrot.lane.b32.xlu0 %v1418, 32
    %v1421 = vpop.permute.xlu0 %1420
    %v1423 = vadd.f32 %v1413, %v1421
    %v1424 = vtanh.pop %v1423
    %1426 = vrot.lane.b32.xlu0 %v1424, 32
    %v1427 = vpop.permute.xlu0 %1426
    %v1429 = vmul.f32 %v1411, %v1427
    %1431 = vrot.lane.b32.xlu0 %v1429, 64
    %v1432 = vpop.permute.xlu0 %1431
    %1434 = vst.msk [vmem:[#allocation2] sm:$0xff] %vm157, %v1432
    %v1435 = vld [vmem:[#allocation3 + $0x8] sm:$0xff]
    %v1436 = vpack.c.bf16 %v1429, %v1429
    %1438 = vrot.lane.b32.xlu0 %v1436, 64
    %v1439 = vpop.permute.xlu0 %1438
    %v1441 = vsel %vm157, %v1439, 0
    %1443 = vmatpush.bf16.msra.mxu0 0
    %1444 = vmatpush.bf16.msra.mxu0 0
    %1445 = vmatpush.bf16.msra.mxu0 0
    %1446 = vmatpush.bf16.msra.mxu0 0
    %1447 = vmatpush.bf16.msra.mxu0 0
    %1448 = vmatpush.bf16.msra.mxu0 0
    %1449 = vmatpush.bf16.msra.mxu0 %v823
    %1450 = vmatpush.bf16.msra.mxu0 %v822
    %1451 = vmatmul.bf16.gmra.mxu0 %v1441
    %v1452 = vpop.f32.mrf.mxu0
    %v1453 = vadd.f32 0.0, %v1452
    %v1454 = vpop.f32.mrf.mxu0
    %1455 = vdwg.mxu0
    %v1456 = vadd.f32 %v1435, %v1453
    %v1457 = vxor.u32 %v1456, 2147483648
    %v1458 = vmul.f32 %v1457, 1.442695
    %v1459 = vpow.pop %v1458
    %v1460 = vadd.f32 %v1459, 1.0
    %v1461 = vrcp.pop %v1460
    %v1462 = vmul.f32 %v1460, %v1461
    %v1463 = vsub.f32 1.0, %v1462
    %v1464 = vmul.f32 %v1461, %v1463
    %v1465 = vadd.f32 %v1461, %v1464
    %vm1466 = vweird.f32 %v1460
    %vm1467 = vweird.f32 %v1461
    %vm1468 = vmor %vm1466, %vm1467
    %v1469 = vsel %vm1468, %v1461, %v1465
    %v1470 = vand.u32 2147483647, %v1460
    %vm1471 = vcmp.eq.f32.partialorder %v1470, 8.507059e+37
    %v1472 = vand.u32 %v1460, 2147483648
    %v1473 = vor.u32 1.1754944e-38, %v1472
    %v1474 = vsel %vm1471, %v1473, %v1469
    %v1475 = vmul.f32 1.0, %v1474
    %v1476 = vtanh.pop %v1456
    %v1477 = vmul.f32 %v1475, %v1423
    %1479 = vrot.lane.b32.xlu0 %v1476, 32
    %v1480 = vpop.permute.xlu0 %1479
    %v1482 = vmul.f32 %v1475, %v1480
    %1484 = vrot.lane.b32.xlu0 %v1482, 32
    %v1485 = vpop.permute.xlu0 %1484
    %v1487 = vadd.f32 %v1477, %v1485
    %v1488 = vtanh.pop %v1487
    %1490 = vrot.lane.b32.xlu0 %v1488, 32
    %v1491 = vpop.permute.xlu0 %1490
    %v1493 = vmul.f32 %v1475, %v1491
    %1495 = vrot.lane.b32.xlu0 %v1493, 64
    %v1496 = vpop.permute.xlu0 %1495
    %1498 = vst.msk [vmem:[#allocation2 + $0x8] sm:$0xff] %vm157, %v1496
    %v1499 = vld [vmem:[#allocation3 + $0x10] sm:$0xff]
    %v1500 = vpack.c.bf16 %v1493, %v1493
    %1502 = vrot.lane.b32.xlu0 %v1500, 64
    %v1503 = vpop.permute.xlu0 %1502
    %v1505 = vsel %vm157, %v1503, 0
    %1507 = vmatpush.bf16.msra.mxu0 0
    %1508 = vmatpush.bf16.msra.mxu0 0
    %1509 = vmatpush.bf16.msra.mxu0 0
    %1510 = vmatpush.bf16.msra.mxu0 0
    %1511 = vmatpush.bf16.msra.mxu0 0
    %1512 = vmatpush.bf16.msra.mxu0 0
    %1513 = vmatpush.bf16.msra.mxu0 %v823
    %1514 = vmatpush.bf16.msra.mxu0 %v822
    %1515 = vmatmul.bf16.gmra.mxu0 %v1505
    %v1516 = vpop.f32.mrf.mxu0
    %v1517 = vadd.f32 0.0, %v1516
    %v1518 = vpop.f32.mrf.mxu0
    %1519 = vdwg.mxu0
    %v1520 = vadd.f32 %v1499, %v1517
    %v1521 = vxor.u32 %v1520, 2147483648
    %v1522 = vmul.f32 %v1521, 1.442695
    %v1523 = vpow.pop %v1522
    %v1524 = vadd.f32 %v1523, 1.0
    %v1525 = vrcp.pop %v1524
    %v1526 = vmul.f32 %v1524, %v1525
    %v1527 = vsub.f32 1.0, %v1526
    %v1528 = vmul.f32 %v1525, %v1527
    %v1529 = vadd.f32 %v1525, %v1528
    %vm1530 = vweird.f32 %v1524
    %vm1531 = vweird.f32 %v1525
    %vm1532 = vmor %vm1530, %vm1531
    %v1533 = vsel %vm1532, %v1525, %v1529
    %v1534 = vand.u32 2147483647, %v1524
    %vm1535 = vcmp.eq.f32.partialorder %v1534, 8.507059e+37
    %v1536 = vand.u32 %v1524, 2147483648
    %v1537 = vor.u32 1.1754944e-38, %v1536
    %v1538 = vsel %vm1535, %v1537, %v1533
    %v1539 = vmul.f32 1.0, %v1538
    %v1540 = vtanh.pop %v1520
    %v1541 = vmul.f32 %v1539, %v1487
    %1543 = vrot.lane.b32.xlu0 %v1540, 32
    %v1544 = vpop.permute.xlu0 %1543
    %v1546 = vmul.f32 %v1539, %v1544
    %1548 = vrot.lane.b32.xlu0 %v1546, 32
    %v1549 = vpop.permute.xlu0 %1548
    %v1551 = vadd.f32 %v1541, %v1549
    %v1552 = vtanh.pop %v1551
    %1554 = vrot.lane.b32.xlu0 %v1552, 32
    %v1555 = vpop.permute.xlu0 %1554
    %v1557 = vmul.f32 %v1539, %v1555
    %1559 = vrot.lane.b32.xlu0 %v1557, 64
    %v1560 = vpop.permute.xlu0 %1559
    %1562 = vst.msk [vmem:[#allocation2 + $0x10] sm:$0xff] %vm157, %v1560
    %v1563 = vld [vmem:[#allocation3 + $0x18] sm:$0xff]
    %v1564 = vpack.c.bf16 %v1557, %v1557
    %1566 = vrot.lane.b32.xlu0 %v1564, 64
    %v1567 = vpop.permute.xlu0 %1566
    %v1569 = vsel %vm157, %v1567, 0
    %1571 = vmatpush.bf16.msra.mxu0 0
    %1572 = vmatpush.bf16.msra.mxu0 0
    %1573 = vmatpush.bf16.msra.mxu0 0
    %1574 = vmatpush.bf16.msra.mxu0 0
    %1575 = vmatpush.bf16.msra.mxu0 0
    %1576 = vmatpush.bf16.msra.mxu0 0
    %1577 = vmatpush.bf16.msra.mxu0 %v823
    %1578 = vmatpush.bf16.msra.mxu0 %v822
    %1579 = vmatmul.bf16.gmra.mxu0 %v1569
    %v1580 = vpop.f32.mrf.mxu0
    %v1581 = vadd.f32 0.0, %v1580
    %v1582 = vpop.f32.mrf.mxu0
    %1583 = vdwg.mxu0
    %v1584 = vadd.f32 %v1563, %v1581
    %v1585 = vxor.u32 %v1584, 2147483648
    %v1586 = vmul.f32 %v1585, 1.442695
    %v1587 = vpow.pop %v1586
    %v1588 = vadd.f32 %v1587, 1.0
    %v1589 = vrcp.pop %v1588
    %v1590 = vmul.f32 %v1588, %v1589
    %v1591 = vsub.f32 1.0, %v1590
    %v1592 = vmul.f32 %v1589, %v1591
    %v1593 = vadd.f32 %v1589, %v1592
    %vm1594 = vweird.f32 %v1588
    %vm1595 = vweird.f32 %v1589
    %vm1596 = vmor %vm1594, %vm1595
    %v1597 = vsel %vm1596, %v1589, %v1593
    %v1598 = vand.u32 2147483647, %v1588
    %vm1599 = vcmp.eq.f32.partialorder %v1598, 8.507059e+37
    %v1600 = vand.u32 %v1588, 2147483648
    %v1601 = vor.u32 1.1754944e-38, %v1600
    %v1602 = vsel %vm1599, %v1601, %v1597
    %v1603 = vmul.f32 1.0, %v1602
    %v1604 = vtanh.pop %v1584
    %v1605 = vmul.f32 %v1603, %v1551
    %1607 = vrot.lane.b32.xlu0 %v1604, 32
    %v1608 = vpop.permute.xlu0 %1607
    %v1610 = vmul.f32 %v1603, %v1608
    %1612 = vrot.lane.b32.xlu0 %v1610, 32
    %v1613 = vpop.permute.xlu0 %1612
    %v1615 = vadd.f32 %v1605, %v1613
    %v1616 = vtanh.pop %v1615
    %1618 = vrot.lane.b32.xlu0 %v1616, 32
    %v1619 = vpop.permute.xlu0 %1618
    %v1621 = vmul.f32 %v1603, %v1619
    %1623 = vrot.lane.b32.xlu0 %v1621, 64
    %v1624 = vpop.permute.xlu0 %1623
    %1626 = vst.msk [vmem:[#allocation2 + $0x18] sm:$0xff] %vm157, %v1624
    %v1627 = vld [vmem:[#allocation3 + $0x20] sm:$0xff]
    %v1628 = vpack.c.bf16 %v1621, %v1621
    %1630 = vrot.lane.b32.xlu0 %v1628, 64
    %v1631 = vpop.permute.xlu0 %1630
    %v1633 = vsel %vm157, %v1631, 0
    %1635 = vmatpush.bf16.msra.mxu0 0
    %1636 = vmatpush.bf16.msra.mxu0 0
    %1637 = vmatpush.bf16.msra.mxu0 0
    %1638 = vmatpush.bf16.msra.mxu0 0
    %1639 = vmatpush.bf16.msra.mxu0 0
    %1640 = vmatpush.bf16.msra.mxu0 0
    %1641 = vmatpush.bf16.msra.mxu0 %v823
    %1642 = vmatpush.bf16.msra.mxu0 %v822
    %1643 = vmatmul.bf16.gmra.mxu0 %v1633
    %v1644 = vpop.f32.mrf.mxu0
    %v1645 = vadd.f32 0.0, %v1644
    %v1646 = vpop.f32.mrf.mxu0
    %1647 = vdwg.mxu0
    %v1648 = vadd.f32 %v1627, %v1645
    %v1649 = vxor.u32 %v1648, 2147483648
    %v1650 = vmul.f32 %v1649, 1.442695
    %v1651 = vpow.pop %v1650
    %v1652 = vadd.f32 %v1651, 1.0
    %v1653 = vrcp.pop %v1652
    %v1654 = vmul.f32 %v1652, %v1653
    %v1655 = vsub.f32 1.0, %v1654
    %v1656 = vmul.f32 %v1653, %v1655
    %v1657 = vadd.f32 %v1653, %v1656
    %vm1658 = vweird.f32 %v1652
    %vm1659 = vweird.f32 %v1653
    %vm1660 = vmor %vm1658, %vm1659
    %v1661 = vsel %vm1660, %v1653, %v1657
    %v1662 = vand.u32 2147483647, %v1652
    %vm1663 = vcmp.eq.f32.partialorder %v1662, 8.507059e+37
    %v1664 = vand.u32 %v1652, 2147483648
    %v1665 = vor.u32 1.1754944e-38, %v1664
    %v1666 = vsel %vm1663, %v1665, %v1661
    %v1667 = vmul.f32 1.0, %v1666
    %v1668 = vtanh.pop %v1648
    %v1669 = vmul.f32 %v1667, %v1615
    %1671 = vrot.lane.b32.xlu0 %v1668, 32
    %v1672 = vpop.permute.xlu0 %1671
    %v1674 = vmul.f32 %v1667, %v1672
    %1676 = vrot.lane.b32.xlu0 %v1674, 32
    %v1677 = vpop.permute.xlu0 %1676
    %v1679 = vadd.f32 %v1669, %v1677
    %v1680 = vtanh.pop %v1679
    %1682 = vrot.lane.b32.xlu0 %v1680, 32
    %v1683 = vpop.permute.xlu0 %1682
    %v1685 = vmul.f32 %v1667, %v1683
    %1687 = vrot.lane.b32.xlu0 %v1685, 64
    %v1688 = vpop.permute.xlu0 %1687
    %1690 = vst.msk [vmem:[#allocation2 + $0x20] sm:$0xff] %vm157, %v1688
    %v1691 = vld [vmem:[#allocation3 + $0x28] sm:$0xff]
    %v1692 = vpack.c.bf16 %v1685, %v1685
    %1694 = vrot.lane.b32.xlu0 %v1692, 64
    %v1695 = vpop.permute.xlu0 %1694
    %v1697 = vsel %vm157, %v1695, 0
    %1699 = vmatpush.bf16.msra.mxu0 0
    %1700 = vmatpush.bf16.msra.mxu0 0
    %1701 = vmatpush.bf16.msra.mxu0 0
    %1702 = vmatpush.bf16.msra.mxu0 0
    %1703 = vmatpush.bf16.msra.mxu0 0
    %1704 = vmatpush.bf16.msra.mxu0 0
    %1705 = vmatpush.bf16.msra.mxu0 %v823
    %1706 = vmatpush.bf16.msra.mxu0 %v822
    %1707 = vmatmul.bf16.gmra.mxu0 %v1697
    %v1708 = vpop.f32.mrf.mxu0
    %v1709 = vadd.f32 0.0, %v1708
    %v1710 = vpop.f32.mrf.mxu0
    %1711 = vdwg.mxu0
    %v1712 = vadd.f32 %v1691, %v1709
    %v1713 = vxor.u32 %v1712, 2147483648
    %v1714 = vmul.f32 %v1713, 1.442695
    %v1715 = vpow.pop %v1714
    %v1716 = vadd.f32 %v1715, 1.0
    %v1717 = vrcp.pop %v1716
    %v1718 = vmul.f32 %v1716, %v1717
    %v1719 = vsub.f32 1.0, %v1718
    %v1720 = vmul.f32 %v1717, %v1719
    %v1721 = vadd.f32 %v1717, %v1720
    %vm1722 = vweird.f32 %v1716
    %vm1723 = vweird.f32 %v1717
    %vm1724 = vmor %vm1722, %vm1723
    %v1725 = vsel %vm1724, %v1717, %v1721
    %v1726 = vand.u32 2147483647, %v1716
    %vm1727 = vcmp.eq.f32.partialorder %v1726, 8.507059e+37
    %v1728 = vand.u32 %v1716, 2147483648
    %v1729 = vor.u32 1.1754944e-38, %v1728
    %v1730 = vsel %vm1727, %v1729, %v1725
    %v1731 = vmul.f32 1.0, %v1730
    %v1732 = vtanh.pop %v1712
    %v1733 = vmul.f32 %v1731, %v1679
    %1735 = vrot.lane.b32.xlu0 %v1732, 32
    %v1736 = vpop.permute.xlu0 %1735
    %v1738 = vmul.f32 %v1731, %v1736
    %1740 = vrot.lane.b32.xlu0 %v1738, 32
    %v1741 = vpop.permute.xlu0 %1740
    %v1743 = vadd.f32 %v1733, %v1741
    %v1744 = vtanh.pop %v1743
    %1746 = vrot.lane.b32.xlu0 %v1744, 32
    %v1747 = vpop.permute.xlu0 %1746
    %v1749 = vmul.f32 %v1731, %v1747
    %1751 = vrot.lane.b32.xlu0 %v1749, 64
    %v1752 = vpop.permute.xlu0 %1751
    %1754 = vst.msk [vmem:[#allocation2 + $0x28] sm:$0xff] %vm157, %v1752
    %v1755 = vld [vmem:[#allocation3 + $0x30] sm:$0xff]
    %v1756 = vpack.c.bf16 %v1749, %v1749
    %1758 = vrot.lane.b32.xlu0 %v1756, 64
    %v1759 = vpop.permute.xlu0 %1758
    %v1761 = vsel %vm157, %v1759, 0
    %1763 = vmatpush.bf16.msra.mxu0 0
    %1764 = vmatpush.bf16.msra.mxu0 0
    %1765 = vmatpush.bf16.msra.mxu0 0
    %1766 = vmatpush.bf16.msra.mxu0 0
    %1767 = vmatpush.bf16.msra.mxu0 0
    %1768 = vmatpush.bf16.msra.mxu0 0
    %1769 = vmatpush.bf16.msra.mxu0 %v823
    %1770 = vmatpush.bf16.msra.mxu0 %v822
    %1771 = vmatmul.bf16.gmra.mxu0 %v1761
    %v1772 = vpop.f32.mrf.mxu0
    %v1773 = vadd.f32 0.0, %v1772
    %v1774 = vpop.f32.mrf.mxu0
    %1775 = vdwg.mxu0
    %v1776 = vadd.f32 %v1755, %v1773
    %v1777 = vxor.u32 %v1776, 2147483648
    %v1778 = vmul.f32 %v1777, 1.442695
    %v1779 = vpow.pop %v1778
    %v1780 = vadd.f32 %v1779, 1.0
    %v1781 = vrcp.pop %v1780
    %v1782 = vmul.f32 %v1780, %v1781
    %v1783 = vsub.f32 1.0, %v1782
    %v1784 = vmul.f32 %v1781, %v1783
    %v1785 = vadd.f32 %v1781, %v1784
    %vm1786 = vweird.f32 %v1780
    %vm1787 = vweird.f32 %v1781
    %vm1788 = vmor %vm1786, %vm1787
    %v1789 = vsel %vm1788, %v1781, %v1785
    %v1790 = vand.u32 2147483647, %v1780
    %vm1791 = vcmp.eq.f32.partialorder %v1790, 8.507059e+37
    %v1792 = vand.u32 %v1780, 2147483648
    %v1793 = vor.u32 1.1754944e-38, %v1792
    %v1794 = vsel %vm1791, %v1793, %v1789
    %v1795 = vmul.f32 1.0, %v1794
    %v1796 = vtanh.pop %v1776
    %v1797 = vmul.f32 %v1795, %v1743
    %1799 = vrot.lane.b32.xlu0 %v1796, 32
    %v1800 = vpop.permute.xlu0 %1799
    %v1802 = vmul.f32 %v1795, %v1800
    %1804 = vrot.lane.b32.xlu0 %v1802, 32
    %v1805 = vpop.permute.xlu0 %1804
    %v1807 = vadd.f32 %v1797, %v1805
    %v1808 = vtanh.pop %v1807
    %1810 = vrot.lane.b32.xlu0 %v1808, 32
    %v1811 = vpop.permute.xlu0 %1810
    %v1813 = vmul.f32 %v1795, %v1811
    %1815 = vrot.lane.b32.xlu0 %v1813, 64
    %v1816 = vpop.permute.xlu0 %1815
    %1818 = vst.msk [vmem:[#allocation2 + $0x30] sm:$0xff] %vm157, %v1816
    %v1819 = vld [vmem:[#allocation3 + $0x38] sm:$0xff]
    %v1820 = vpack.c.bf16 %v1813, %v1813
    %1822 = vrot.lane.b32.xlu0 %v1820, 64
    %v1823 = vpop.permute.xlu0 %1822
    %v1825 = vsel %vm157, %v1823, 0
    %1827 = vmatpush.bf16.msra.mxu0 0
    %1828 = vmatpush.bf16.msra.mxu0 0
    %1829 = vmatpush.bf16.msra.mxu0 0
    %1830 = vmatpush.bf16.msra.mxu0 0
    %1831 = vmatpush.bf16.msra.mxu0 0
    %1832 = vmatpush.bf16.msra.mxu0 0
    %1833 = vmatpush.bf16.msra.mxu0 %v823
    %1834 = vmatpush.bf16.msra.mxu0 %v822
    %1835 = vmatmul.bf16.gmra.mxu0 %v1825
    %v1836 = vpop.f32.mrf.mxu0
    %v1837 = vadd.f32 0.0, %v1836
    %v1838 = vpop.f32.mrf.mxu0
    %1839 = vdwg.mxu0
    %v1840 = vadd.f32 %v1819, %v1837
    %v1841 = vxor.u32 %v1840, 2147483648
    %v1842 = vmul.f32 %v1841, 1.442695
    %v1843 = vpow.pop %v1842
    %v1844 = vadd.f32 %v1843, 1.0
    %v1845 = vrcp.pop %v1844
    %v1846 = vmul.f32 %v1844, %v1845
    %v1847 = vsub.f32 1.0, %v1846
    %v1848 = vmul.f32 %v1845, %v1847
    %v1849 = vadd.f32 %v1845, %v1848
    %vm1850 = vweird.f32 %v1844
    %vm1851 = vweird.f32 %v1845
    %vm1852 = vmor %vm1850, %vm1851
    %v1853 = vsel %vm1852, %v1845, %v1849
    %v1854 = vand.u32 2147483647, %v1844
    %vm1855 = vcmp.eq.f32.partialorder %v1854, 8.507059e+37
    %v1856 = vand.u32 %v1844, 2147483648
    %v1857 = vor.u32 1.1754944e-38, %v1856
    %v1858 = vsel %vm1855, %v1857, %v1853
    %v1859 = vmul.f32 1.0, %v1858
    %v1860 = vtanh.pop %v1840
    %v1861 = vmul.f32 %v1859, %v1807
    %1863 = vrot.lane.b32.xlu0 %v1860, 32
    %v1864 = vpop.permute.xlu0 %1863
    %v1866 = vmul.f32 %v1859, %v1864
    %1868 = vrot.lane.b32.xlu0 %v1866, 32
    %v1869 = vpop.permute.xlu0 %1868
    %v1871 = vadd.f32 %v1861, %v1869
    %v1872 = vtanh.pop %v1871
    %1874 = vrot.lane.b32.xlu0 %v1872, 32
    %v1875 = vpop.permute.xlu0 %1874
    %v1877 = vmul.f32 %v1859, %v1875
    %1879 = vrot.lane.b32.xlu0 %v1877, 64
    %v1880 = vpop.permute.xlu0 %1879
    %1882 = vst.msk [vmem:[#allocation2 + $0x38] sm:$0xff] %vm157, %v1880
    %v1883 = vld [vmem:[#allocation2] sm:$0xff]
    %v1884 = vld [vmem:[#allocation2 + $0x8] sm:$0xff]
    %v1885 = vld [vmem:[#allocation2 + $0x10] sm:$0xff]
    %v1886 = vld [vmem:[#allocation2 + $0x18] sm:$0xff]
    %v1887 = vld [vmem:[#allocation2 + $0x20] sm:$0xff]
    %v1888 = vld [vmem:[#allocation2 + $0x28] sm:$0xff]
    %v1889 = vld [vmem:[#allocation2 + $0x30] sm:$0xff]
    %v1890 = vld [vmem:[#allocation2 + $0x38] sm:$0xff]
    %v1891 = vpack.c.bf16 %v1884, %v1883
    %v1892 = vpack.c.bf16 %v1886, %v1885
    %v1893 = vpack.c.bf16 %v1888, %v1887
    %v1894 = vpack.c.bf16 %v1890, %v1889
    %v1895 = vld [vmem:[%s9] sm:$0xf]
    %v1896 = vld [vmem:[%s9 + $0x4] sm:$0xf]
    %v1897 = vld [vmem:[%s9 + $0x8] sm:$0xf]
    %v1898 = vld [vmem:[%s9 + $0xc] sm:$0xf]
    %v1899 = vld [vmem:[#allocation4] sm:$0x1]
    %v1901 = vperm.slane %v1899, 0
    %v1907 = vunpack.c.l.b16 %v1895
    %v1908 = vunpack.c.l.b16 %v1896
    %v1909 = vunpack.c.l.b16 %v1897
    %v1910 = vunpack.c.l.b16 %v1898
    %v1911 = vpack.c.b16 %v1908, %v1907
    %v1912 = vpack.c.b16 %v1910, %v1909
    %v1916 = vsel %vm157, %v1891, 0
    %v1919 = vsel %vm157, %v1892, 0
    %v1922 = vsel %vm157, %v1893, 0
    %v1925 = vsel %vm157, %v1894, 0
    %1927 = vmatpush.bf16.msra.mxu0 0
    %1928 = vmatpush.bf16.msra.mxu0 0
    %1929 = vmatpush.bf16.msra.mxu0 0
    %1930 = vmatpush.bf16.msra.mxu0 0
    %1931 = vmatpush.bf16.msra.mxu0 0
    %1932 = vmatpush.bf16.msra.mxu0 0
    %1933 = vmatpush.bf16.msra.mxu0 %v1912
    %1934 = vmatpush.bf16.msra.mxu0 %v1911
    %1935 = vmatmul.bf16.gmra.mxu0 %v1916
    %v1936 = vpop.f32.mrf.mxu0
    %v1937 = vadd.f32 %v1901, %v1936
    %v1938 = vpop.f32.mrf.mxu0
    %v1939 = vadd.f32 %v1901, %v1938
    %1940 = vmatmul.bf16.gmra.mxu0 %v1919
    %v1941 = vpop.f32.mrf.mxu0
    %v1942 = vadd.f32 %v1901, %v1941
    %v1943 = vpop.f32.mrf.mxu0
    %v1944 = vadd.f32 %v1901, %v1943
    %1945 = vmatmul.bf16.gmra.mxu0 %v1922
    %v1946 = vpop.f32.mrf.mxu0
    %v1947 = vadd.f32 %v1901, %v1946
    %v1948 = vpop.f32.mrf.mxu0
    %v1949 = vadd.f32 %v1901, %v1948
    %1950 = vmatmul.bf16.gmra.mxu0 %v1925
    %v1951 = vpop.f32.mrf.mxu0
    %v1952 = vadd.f32 %v1901, %v1951
    %v1953 = vpop.f32.mrf.mxu0
    %v1954 = vadd.f32 %v1901, %v1953
    %1955 = vdwg.mxu0
    %vm1956 = vcmask 7168
    %1957 = vst.msk [vmem:[%s11] sm:$0xff] %vm1956, %v1937
    %1958 = vst.msk [vmem:[%s11 + $0x8] sm:$0xff] %vm1956, %v1939
    %1959 = vst.msk [vmem:[%s11 + $0x10] sm:$0xff] %vm1956, %v1942
    %1960 = vst.msk [vmem:[%s11 + $0x18] sm:$0xff] %vm1956, %v1944
    %1961 = vst.msk [vmem:[%s11 + $0x20] sm:$0xff] %vm1956, %v1947
    %1962 = vst.msk [vmem:[%s11 + $0x28] sm:$0xff] %vm1956, %v1949
    %1963 = vst.msk [vmem:[%s11 + $0x30] sm:$0xff] %vm1956, %v1952
    %1964 = vst.msk [vmem:[%s11 + $0x38] sm:$0xff] %vm1956, %v1954
    // Predicated region
    $region66: #{tpu_custom_call.1} parent=1 // pred_check
      _
    $region67: #{tpu_custom_call.1} parent=1 // pred_check_branch
      %1966 = sbr.rel (0) target = $region69
    $region68: #{tpu_custom_call.1} parent=1 // pred_region
      _
    $region69: #{tpu_custom_call.1} parent=1 // pred_fallthru
      _
    // Predicated region
    $region70: #{tpu_custom_call.1} parent=1 // pred_check
      _
    $region71: #{tpu_custom_call.1} parent=1 // pred_check_branch
      %1968 = sbr.rel (0) target = $region73
    $region72: #{tpu_custom_call.1} parent=1 // pred_region
      _
    $region73: #{tpu_custom_call.1} parent=1 // pred_fallthru
      _
    %1969 = vsyncpa [#allocation6], 1
    %1970 = vsyncpa [#allocation8], 1
    %1971 = vsyncpa [#allocation11], 1

</llo_original>
